<compile_context>
chip_gen: v5e
topology: v5e:2x2
jax: 0.10.0
libtpu: 0.0.40
codegen_flags: <defaults>
</compile_context>

<pallas_src>
import math

import jax
import jax.numpy as jnp
from jax.experimental import pallas as pl
from jax.experimental.pallas import tpu as pltpu


# ----------------------------------------------------------------------------
# Fused kernel: one grid step = one batch element through ALL layers.
# ----------------------------------------------------------------------------
def make_transformer_kernel(depth, N, D, heads, mlp_dim, alpha, eps=1e-5):
    hd = D // heads

    def layer_norm(y, gamma, beta):
        mu = jnp.mean(y, axis=-1, keepdims=True)
        var = jnp.mean((y - mu) ** 2, axis=-1, keepdims=True)
        return (y - mu) * jax.lax.rsqrt(var + eps) * gamma + beta

    def split_heads(t):  # (N, D) -> (H, N, hd); static lane slices + leading-dim stack
        return jnp.stack([t[:, h * hd:(h + 1) * hd] for h in range(heads)], axis=0)

    def kernel(x_ref, wqkv_ref, wout_ref, w1_ref, w2_ref, vecs_ref, o_ref):
        x = x_ref[...]                                               # (N, D)

        # Static unroll over layers: depth is small; weights are VMEM-resident
        # so ref[l] with a Python int is a static, cheap slab load.
        for l in range(depth):
            vec = vecs_ref[l]                                        # (8, Vmax)
            bout    = vec[0:1, :D]
            gamma_a = vec[1:2, :D]
            beta_a  = vec[2:3, :D]
            b1      = vec[3:4, :mlp_dim]
            b2      = vec[4:5, :D]
            gamma_f = vec[5:6, :D]
            beta_f  = vec[6:7, :D]

            # ---------------- PostNorm(Residual(Attention)) ----------------
            # Single full-contraction MXU matmul for Q|K|V (scale folded in Wq).
            qkv = jnp.dot(x, wqkv_ref[l],
                          preferred_element_type=jnp.float32)        # (N, 3D)
            q = split_heads(qkv[:, 0:D])                             # (H, N, hd)
            k = split_heads(qkv[:, D:2 * D])
            v = split_heads(qkv[:, 2 * D:3 * D])

            dots = jnp.einsum('hnd,hmd->hnm', q, k,
                              preferred_element_type=jnp.float32)    # (H, N, N)
            m = jnp.max(dots, axis=-1, keepdims=True)
            e = jnp.exp(dots - m)
            attn = e / jnp.sum(e, axis=-1, keepdims=True)
            # (nan_to_num dropped: softmax of finite scores cannot produce NaN.)
            av = jnp.einsum('hnm,hmd->hnd', attn, v,
                            preferred_element_type=jnp.float32)      # (H, N, hd)

            # concat-over-heads @ (D,D) == per-head (hd,D) matmuls summed over h.
            proj = jnp.einsum('hnf,hfd->hnd', av, wout_ref[l],
                              preferred_element_type=jnp.float32)    # (H, N, D)
            attn_out = jnp.sum(proj, axis=0) + bout                  # (N, D)

            x = layer_norm(attn_out + x * alpha, gamma_a, beta_a)

            # ---------------- PostNorm(Residual(FeedForward)) ----------------
            h1 = jnp.dot(x, w1_ref[l],
                         preferred_element_type=jnp.float32) + b1    # (N, mlp)
            h1 = jnp.maximum(h1, 0.0)                                # ReLU
            y = jnp.dot(h1, w2_ref[l],
                        preferred_element_type=jnp.float32) + b2     # (N, D)

            x = layer_norm(y + x * alpha, gamma_f, beta_f)

        o_ref[...] = x

    return kernel


# ----------------------------------------------------------------------------
# Wrapper: single pallas_call, grid = (batch,), weights fully VMEM-resident.
# ----------------------------------------------------------------------------
def transformer_forward(x, stacked, *, heads, alpha):
    B, N, D = x.shape
    assert D % heads == 0
    depth = stacked["wqkv"].shape[0]
    mlp_dim = stacked["w1"].shape[-1]

    kernel = make_transformer_kernel(depth, N, D, heads, mlp_dim, alpha)

    def resident(shape):
        # Full-array block, same block for every grid index -> DMA'd once,
        # stays resident in VMEM for the whole call.
        nd = len(shape)
        return pl.BlockSpec(shape, lambda b, _nd=nd: (0,) * _nd)

    return pl.pallas_call(
        kernel,
        out_shape=jax.ShapeDtypeStruct((B, N, D), x.dtype),
        grid=(B,),
        in_specs=[
            pl.BlockSpec((None, N, D), lambda b: (b, 0, 0)),   # x  (batch row)
            resident(stacked["wqkv"].shape),                   # (depth, D, 3D)
            resident(stacked["wout"].shape),                   # (depth, H, hd, D)
            resident(stacked["w1"].shape),                     # (depth, D, mlp)
            resident(stacked["w2"].shape),                     # (depth, mlp, D)
            resident(stacked["vecs"].shape),                   # (depth, 8, Vmax)
        ],
        out_specs=pl.BlockSpec((None, N, D), lambda b: (b, 0, 0)),
        # Batch axis parallel: with B >= 2 both v7x TensorCores get work.
        compiler_params=pltpu.CompilerParams(
            dimension_semantics=("parallel",)),
    )(x, stacked["wqkv"], stacked["wout"], stacked["w1"],
      stacked["w2"], stacked["vecs"])


# ----------------------------------------------------------------------------
# Parameters: "natural" per-layer params + restructuring into kernel-ready
# stacked tensors (scale folded into Wq, small vectors packed into one tensor).
# ----------------------------------------------------------------------------
def init_params(key, dim, depth, mlp_dim):
    layers = []
    for _ in range(depth):
        key, k1, k2, k3, k4 = jax.random.split(key, 5)
        layers.append(dict(
            wqkv=0.05 * jax.random.normal(k1, (dim, 3 * dim), jnp.float32),
            wout=0.05 * jax.random.normal(k2, (dim, dim), jnp.float32),
            bout=jnp.zeros((dim,), jnp.float32),
            gamma_a=jnp.ones((dim,), jnp.float32),
            beta_a=jnp.zeros((dim,), jnp.float32),
            w1=0.05 * jax.random.normal(k3, (dim, mlp_dim), jnp.float32),
            b1=jnp.zeros((mlp_dim,), jnp.float32),
            w2=0.05 * jax.random.normal(k4, (mlp_dim, dim), jnp.float32),
            b2=jnp.zeros((dim,), jnp.float32),
            gamma_f=jnp.ones((dim,), jnp.float32),
            beta_f=jnp.zeros((dim,), jnp.float32),
        ))
    return layers


def prepare_params(layers, heads, scale):
    D = layers[0]["wout"].shape[0]
    mlp_dim = layers[0]["w1"].shape[1]
    hd = D // heads
    vmax = max(D, mlp_dim)

    wqkv_s, wout_s, w1_s, w2_s, vecs_s = [], [], [], [], []
    for p in layers:
        wq = p["wqkv"][:, 0 * D:1 * D] * scale   # fold softmax scale into Wq
        wk = p["wqkv"][:, 1 * D:2 * D]
        wv = p["wqkv"][:, 2 * D:3 * D]
        wqkv_s.append(jnp.concatenate([wq, wk, wv], axis=1))     # (D, 3D)
        wout_s.append(p["wout"].reshape(heads, hd, D))           # (H, hd, D)
        w1_s.append(p["w1"])
        w2_s.append(p["w2"])

        def row(v):
            v = v.reshape(1, -1)
            return jnp.pad(v, ((0, 0), (0, vmax - v.shape[1])))
        vecs_s.append(jnp.concatenate(
            [row(p["bout"]), row(p["gamma_a"]), row(p["beta_a"]),
             row(p["b1"]), row(p["b2"]), row(p["gamma_f"]), row(p["beta_f"]),
             jnp.zeros((1, vmax), jnp.float32)], axis=0))        # (8, Vmax)

    return dict(
        wqkv=jnp.stack(wqkv_s, axis=0),   # (depth, D, 3D)
        wout=jnp.stack(wout_s, axis=0),   # (depth, H, hd, D)
        w1=jnp.stack(w1_s, axis=0),       # (depth, D, mlp)
        w2=jnp.stack(w2_s, axis=0),       # (depth, mlp, D)
        vecs=jnp.stack(vecs_s, axis=0),   # (depth, 8, Vmax)
    )


# ----------------------------------------------------------------------------
# Pure-JAX reference (mirrors the PyTorch module) for a correctness check
# ----------------------------------------------------------------------------
def transformer_reference(x, layers, *, heads, alpha, scale, eps=1e-5):
    B, N, D = x.shape
    hd = D // heads
    hp = jax.lax.Precision.HIGHEST

    def ln(y, g, b):
        mu = jnp.mean(y, -1, keepdims=True)
        var = jnp.mean((y - mu) ** 2, -1, keepdims=True)
        return (y - mu) / jnp.sqrt(var + eps) * g + b

    for p in layers:
        qkv = jnp.einsum('bnd,de->bne', x, p["wqkv"], precision=hp)
        q, k, v = jnp.split(qkv, 3, axis=-1)
        split = lambda t: t.reshape(B, N, heads, hd).transpose(0, 2, 1, 3)
        q, k, v = split(q), split(k), split(v)
        dots = jnp.einsum('bhid,bhjd->bhij', q, k, precision=hp) * scale
        attn = jax.nn.softmax(dots, axis=-1)
        out = jnp.einsum('bhij,bhjd->bhid', attn, v, precision=hp)
        out = out.transpose(0, 2, 1, 3).reshape(B, N, D)
        out = jnp.einsum('bnd,de->bne', out, p["wout"], precision=hp) + p["bout"]
        x = ln(out + x * alpha, p["gamma_a"], p["beta_a"])
        h = jax.nn.relu(jnp.einsum('bnd,dh->bnh', x, p["w1"], precision=hp) + p["b1"])
        y = jnp.einsum('bnh,hd->bnd', h, p["w2"], precision=hp) + p["b2"]
        x = ln(y + x * alpha, p["gamma_f"], p["beta_f"])
    return x


if __name__ == "__main__":
    # Small shapes consistent with the module: dim=32, depth=2, heads=8, mlp_dim=64
    B, N, DIM, DEPTH, HEADS, MLP = 2, 8, 32, 2, 8, 64

    key = jax.random.PRNGKey(0)
    key, xkey = jax.random.split(key)
    x = jax.random.normal(xkey, (B, N, DIM), jnp.float32)

    layers = init_params(key, DIM, DEPTH, MLP)
    scale = DIM ** (-0.5)                  # reference uses dim**-0.5 (not head_dim) — intentional
    alpha = math.pow(2.0 * DEPTH, 0.25)
    stacked = prepare_params(layers, HEADS, scale)

    out = transformer_forward(x, stacked, heads=HEADS, alpha=alpha)
    out = jax.block_until_ready(out)
    assert out.shape == (B, N, DIM) and out.dtype == jnp.float32

    ref = transformer_reference(x, layers, heads=HEADS, alpha=alpha, scale=scale)
    err = float(jnp.max(jnp.abs(out - ref)))
    assert err < 5e-3, f"max abs error vs reference: {err}"

    print("KERNEL_OK")
</pallas_src>

<mosaic_0001>
module attributes {stable_mosaic.version = 11 : i64} {
  func.func @kernel(%arg0: i32, %arg1: memref<1x8x32xf32, #tpu.memory_space<vmem>>, %arg2: memref<2x32x96xf32, #tpu.memory_space<vmem>>, %arg3: memref<2x8x4x32xf32, #tpu.memory_space<vmem>>, %arg4: memref<2x32x64xf32, #tpu.memory_space<vmem>>, %arg5: memref<2x64x32xf32, #tpu.memory_space<vmem>>, %arg6: memref<2x8x64xf32, #tpu.memory_space<vmem>>, %arg7: memref<1x8x32xf32, #tpu.memory_space<vmem>>) attributes {dimension_semantics = [#tpu.dimension_semantics<parallel>], iteration_bounds = array<i64: 2>, scalar_prefetch = 0 : i64, scratch_operands = 0 : i64, tpu.core_type = #tpu.core_type<tc>, window_params = [{transform_indices = @transform_0, window_bounds = array<i64: 1, 8, 32>}, {pipeline_mode = #tpu.pipeline_mode<synchronous>, transform_indices = @transform_1, window_bounds = array<i64: 2, 32, 96>}, {pipeline_mode = #tpu.pipeline_mode<synchronous>, transform_indices = @transform_2, window_bounds = array<i64: 2, 8, 4, 32>}, {pipeline_mode = #tpu.pipeline_mode<synchronous>, transform_indices = @transform_3, window_bounds = array<i64: 2, 32, 64>}, {pipeline_mode = #tpu.pipeline_mode<synchronous>, transform_indices = @transform_4, window_bounds = array<i64: 2, 64, 32>}, {pipeline_mode = #tpu.pipeline_mode<synchronous>, transform_indices = @transform_5, window_bounds = array<i64: 2, 8, 64>}, {transform_indices = @transform_6, window_bounds = array<i64: 1, 8, 32>}]} {
    %c0 = arith.constant 0 : index
    %c0_0 = arith.constant 0 : index
    %c0_1 = arith.constant 0 : index
    %0 = vector.load %arg1[%c0, %c0_0, %c0_1] : memref<1x8x32xf32, #tpu.memory_space<vmem>>, vector<1x8x32xf32>
    %1 = vector.shape_cast %0 : vector<1x8x32xf32> to vector<8x32xf32>
    %c0_2 = arith.constant 0 : index
    %c0_3 = arith.constant 0 : index
    %c0_4 = arith.constant 0 : index
    %2 = vector.load %arg6[%c0_2, %c0_3, %c0_4] : memref<2x8x64xf32, #tpu.memory_space<vmem>>, vector<1x8x64xf32>
    %3 = vector.shape_cast %2 : vector<1x8x64xf32> to vector<8x64xf32>
    %4 = vector.extract_strided_slice %3 {offsets = [0, 0], sizes = [1, 32], strides = [1, 1]} : vector<8x64xf32> to vector<1x32xf32>
    %5 = vector.extract_strided_slice %3 {offsets = [1, 0], sizes = [1, 32], strides = [1, 1]} : vector<8x64xf32> to vector<1x32xf32>
    %6 = vector.extract_strided_slice %3 {offsets = [2, 0], sizes = [1, 32], strides = [1, 1]} : vector<8x64xf32> to vector<1x32xf32>
    %7 = vector.extract_strided_slice %3 {offsets = [3, 0], sizes = [1, 64], strides = [1, 1]} : vector<8x64xf32> to vector<1x64xf32>
    %8 = vector.extract_strided_slice %3 {offsets = [4, 0], sizes = [1, 32], strides = [1, 1]} : vector<8x64xf32> to vector<1x32xf32>
    %9 = vector.extract_strided_slice %3 {offsets = [5, 0], sizes = [1, 32], strides = [1, 1]} : vector<8x64xf32> to vector<1x32xf32>
    %10 = vector.extract_strided_slice %3 {offsets = [6, 0], sizes = [1, 32], strides = [1, 1]} : vector<8x64xf32> to vector<1x32xf32>
    %c0_5 = arith.constant 0 : index
    %c0_6 = arith.constant 0 : index
    %c0_7 = arith.constant 0 : index
    %11 = vector.load %arg2[%c0_5, %c0_6, %c0_7] : memref<2x32x96xf32, #tpu.memory_space<vmem>>, vector<1x32x96xf32>
    %12 = vector.shape_cast %11 : vector<1x32x96xf32> to vector<32x96xf32>
    %cst = arith.constant dense<0.000000e+00> : vector<8x96xf32>
    %13 = tpu.matmul %1, %12, %cst {dimension_numbers = #tpu.dot_dimension_numbers<[1], [0], [0], [1], [0, 0, 1, 1], [], []>} : vector<8x32xf32>, vector<32x96xf32>, vector<8x96xf32> -> vector<8x96xf32>
    %14 = vector.extract_strided_slice %13 {offsets = [0, 0], sizes = [8, 32], strides = [1, 1]} : vector<8x96xf32> to vector<8x32xf32>
    %15 = vector.extract_strided_slice %14 {offsets = [0, 0], sizes = [8, 4], strides = [1, 1]} : vector<8x32xf32> to vector<8x4xf32>
    %16 = vector.extract_strided_slice %14 {offsets = [0, 4], sizes = [8, 4], strides = [1, 1]} : vector<8x32xf32> to vector<8x4xf32>
    %17 = vector.extract_strided_slice %14 {offsets = [0, 8], sizes = [8, 4], strides = [1, 1]} : vector<8x32xf32> to vector<8x4xf32>
    %18 = vector.extract_strided_slice %14 {offsets = [0, 12], sizes = [8, 4], strides = [1, 1]} : vector<8x32xf32> to vector<8x4xf32>
    %19 = vector.extract_strided_slice %14 {offsets = [0, 16], sizes = [8, 4], strides = [1, 1]} : vector<8x32xf32> to vector<8x4xf32>
    %20 = vector.extract_strided_slice %14 {offsets = [0, 20], sizes = [8, 4], strides = [1, 1]} : vector<8x32xf32> to vector<8x4xf32>
    %21 = vector.extract_strided_slice %14 {offsets = [0, 24], sizes = [8, 4], strides = [1, 1]} : vector<8x32xf32> to vector<8x4xf32>
    %22 = vector.extract_strided_slice %14 {offsets = [0, 28], sizes = [8, 4], strides = [1, 1]} : vector<8x32xf32> to vector<8x4xf32>
    %23 = vector.shape_cast %15 : vector<8x4xf32> to vector<1x8x4xf32>
    %24 = vector.shape_cast %16 : vector<8x4xf32> to vector<1x8x4xf32>
    %25 = vector.shape_cast %17 : vector<8x4xf32> to vector<1x8x4xf32>
    %26 = vector.shape_cast %18 : vector<8x4xf32> to vector<1x8x4xf32>
    %27 = vector.shape_cast %19 : vector<8x4xf32> to vector<1x8x4xf32>
    %28 = vector.shape_cast %20 : vector<8x4xf32> to vector<1x8x4xf32>
    %29 = vector.shape_cast %21 : vector<8x4xf32> to vector<1x8x4xf32>
    %30 = vector.shape_cast %22 : vector<8x4xf32> to vector<1x8x4xf32>
    %31 = tpu.concatenate %23, %24, %25, %26, %27, %28, %29, %30 in 0 : vector<1x8x4xf32>, vector<1x8x4xf32>, vector<1x8x4xf32>, vector<1x8x4xf32>, vector<1x8x4xf32>, vector<1x8x4xf32>, vector<1x8x4xf32>, vector<1x8x4xf32> -> vector<8x8x4xf32>
    %32 = vector.extract_strided_slice %13 {offsets = [0, 32], sizes = [8, 32], strides = [1, 1]} : vector<8x96xf32> to vector<8x32xf32>
    %33 = vector.extract_strided_slice %32 {offsets = [0, 0], sizes = [8, 4], strides = [1, 1]} : vector<8x32xf32> to vector<8x4xf32>
    %34 = vector.extract_strided_slice %32 {offsets = [0, 4], sizes = [8, 4], strides = [1, 1]} : vector<8x32xf32> to vector<8x4xf32>
    %35 = vector.extract_strided_slice %32 {offsets = [0, 8], sizes = [8, 4], strides = [1, 1]} : vector<8x32xf32> to vector<8x4xf32>
    %36 = vector.extract_strided_slice %32 {offsets = [0, 12], sizes = [8, 4], strides = [1, 1]} : vector<8x32xf32> to vector<8x4xf32>
    %37 = vector.extract_strided_slice %32 {offsets = [0, 16], sizes = [8, 4], strides = [1, 1]} : vector<8x32xf32> to vector<8x4xf32>
    %38 = vector.extract_strided_slice %32 {offsets = [0, 20], sizes = [8, 4], strides = [1, 1]} : vector<8x32xf32> to vector<8x4xf32>
    %39 = vector.extract_strided_slice %32 {offsets = [0, 24], sizes = [8, 4], strides = [1, 1]} : vector<8x32xf32> to vector<8x4xf32>
    %40 = vector.extract_strided_slice %32 {offsets = [0, 28], sizes = [8, 4], strides = [1, 1]} : vector<8x32xf32> to vector<8x4xf32>
    %41 = vector.shape_cast %33 : vector<8x4xf32> to vector<1x8x4xf32>
    %42 = vector.shape_cast %34 : vector<8x4xf32> to vector<1x8x4xf32>
    %43 = vector.shape_cast %35 : vector<8x4xf32> to vector<1x8x4xf32>
    %44 = vector.shape_cast %36 : vector<8x4xf32> to vector<1x8x4xf32>
    %45 = vector.shape_cast %37 : vector<8x4xf32> to vector<1x8x4xf32>
    %46 = vector.shape_cast %38 : vector<8x4xf32> to vector<1x8x4xf32>
    %47 = vector.shape_cast %39 : vector<8x4xf32> to vector<1x8x4xf32>
    %48 = vector.shape_cast %40 : vector<8x4xf32> to vector<1x8x4xf32>
    %49 = tpu.concatenate %41, %42, %43, %44, %45, %46, %47, %48 in 0 : vector<1x8x4xf32>, vector<1x8x4xf32>, vector<1x8x4xf32>, vector<1x8x4xf32>, vector<1x8x4xf32>, vector<1x8x4xf32>, vector<1x8x4xf32>, vector<1x8x4xf32> -> vector<8x8x4xf32>
    %50 = vector.extract_strided_slice %13 {offsets = [0, 64], sizes = [8, 32], strides = [1, 1]} : vector<8x96xf32> to vector<8x32xf32>
    %51 = vector.extract_strided_slice %50 {offsets = [0, 0], sizes = [8, 4], strides = [1, 1]} : vector<8x32xf32> to vector<8x4xf32>
    %52 = vector.extract_strided_slice %50 {offsets = [0, 4], sizes = [8, 4], strides = [1, 1]} : vector<8x32xf32> to vector<8x4xf32>
    %53 = vector.extract_strided_slice %50 {offsets = [0, 8], sizes = [8, 4], strides = [1, 1]} : vector<8x32xf32> to vector<8x4xf32>
    %54 = vector.extract_strided_slice %50 {offsets = [0, 12], sizes = [8, 4], strides = [1, 1]} : vector<8x32xf32> to vector<8x4xf32>
    %55 = vector.extract_strided_slice %50 {offsets = [0, 16], sizes = [8, 4], strides = [1, 1]} : vector<8x32xf32> to vector<8x4xf32>
    %56 = vector.extract_strided_slice %50 {offsets = [0, 20], sizes = [8, 4], strides = [1, 1]} : vector<8x32xf32> to vector<8x4xf32>
    %57 = vector.extract_strided_slice %50 {offsets = [0, 24], sizes = [8, 4], strides = [1, 1]} : vector<8x32xf32> to vector<8x4xf32>
    %58 = vector.extract_strided_slice %50 {offsets = [0, 28], sizes = [8, 4], strides = [1, 1]} : vector<8x32xf32> to vector<8x4xf32>
    %59 = vector.shape_cast %51 : vector<8x4xf32> to vector<1x8x4xf32>
    %60 = vector.shape_cast %52 : vector<8x4xf32> to vector<1x8x4xf32>
    %61 = vector.shape_cast %53 : vector<8x4xf32> to vector<1x8x4xf32>
    %62 = vector.shape_cast %54 : vector<8x4xf32> to vector<1x8x4xf32>
    %63 = vector.shape_cast %55 : vector<8x4xf32> to vector<1x8x4xf32>
    %64 = vector.shape_cast %56 : vector<8x4xf32> to vector<1x8x4xf32>
    %65 = vector.shape_cast %57 : vector<8x4xf32> to vector<1x8x4xf32>
    %66 = vector.shape_cast %58 : vector<8x4xf32> to vector<1x8x4xf32>
    %67 = tpu.concatenate %59, %60, %61, %62, %63, %64, %65, %66 in 0 : vector<1x8x4xf32>, vector<1x8x4xf32>, vector<1x8x4xf32>, vector<1x8x4xf32>, vector<1x8x4xf32>, vector<1x8x4xf32>, vector<1x8x4xf32>, vector<1x8x4xf32> -> vector<8x8x4xf32>
    "tpu.trace_start"() <{level = 10 : i32, message = "hnd,hmd->hnm"}> : () -> ()
    %cst_8 = arith.constant dense<0.000000e+00> : vector<8x8x8xf32>
    %68 = tpu.matmul %31, %49, %cst_8 {dimension_numbers = #tpu.dot_dimension_numbers<[2], [2], [1], [1], [0, 0, 0, 1, 1, 1], [0], [0]>} : vector<8x8x4xf32>, vector<8x8x4xf32>, vector<8x8x8xf32> -> vector<8x8x8xf32>
    "tpu.trace_stop"() : () -> ()
    %cst_9 = arith.constant dense<0xFF800000> : vector<8x8xf32>
    %69 = vector.multi_reduction <maximumf>, %68, %cst_9 [2] : vector<8x8x8xf32> to vector<8x8xf32>
    %70 = vector.shape_cast %69 : vector<8x8xf32> to vector<8x8x1xf32>
    %71 = vector.broadcast %70 : vector<8x8x1xf32> to vector<8x8x8xf32>
    %72 = arith.subf %68, %71 : vector<8x8x8xf32>
    %73 = math.exp %72 : vector<8x8x8xf32>
    %cst_10 = arith.constant dense<0.000000e+00> : vector<8x8xf32>
    %74 = vector.multi_reduction <add>, %73, %cst_10 [2] : vector<8x8x8xf32> to vector<8x8xf32>
    %75 = vector.shape_cast %74 : vector<8x8xf32> to vector<8x8x1xf32>
    %76 = vector.broadcast %75 : vector<8x8x1xf32> to vector<8x8x8xf32>
    %77 = arith.divf %73, %76 : vector<8x8x8xf32>
    "tpu.trace_start"() <{level = 10 : i32, message = "hnm,hmd->hnd"}> : () -> ()
    %cst_11 = arith.constant dense<0.000000e+00> : vector<8x8x4xf32>
    %78 = tpu.matmul %77, %67, %cst_11 {dimension_numbers = #tpu.dot_dimension_numbers<[2], [1], [1], [2], [0, 0, 0, 1, 1, 2], [0], [0]>} : vector<8x8x8xf32>, vector<8x8x4xf32>, vector<8x8x4xf32> -> vector<8x8x4xf32>
    "tpu.trace_stop"() : () -> ()
    %c0_12 = arith.constant 0 : index
    %c0_13 = arith.constant 0 : index
    %c0_14 = arith.constant 0 : index
    %c0_15 = arith.constant 0 : index
    %79 = vector.load %arg3[%c0_12, %c0_13, %c0_14, %c0_15] : memref<2x8x4x32xf32, #tpu.memory_space<vmem>>, vector<1x8x4x32xf32>
    %80 = vector.shape_cast %79 : vector<1x8x4x32xf32> to vector<8x4x32xf32>
    "tpu.trace_start"() <{level = 10 : i32, message = "hnf,hfd->hnd"}> : () -> ()
    %cst_16 = arith.constant dense<0.000000e+00> : vector<8x8x32xf32>
    %81 = tpu.matmul %78, %80, %cst_16 {dimension_numbers = #tpu.dot_dimension_numbers<[2], [1], [1], [2], [0, 0, 0, 1, 1, 2], [0], [0]>} : vector<8x8x4xf32>, vector<8x4x32xf32>, vector<8x8x32xf32> -> vector<8x8x32xf32>
    "tpu.trace_stop"() : () -> ()
    %cst_17 = arith.constant dense<0.000000e+00> : vector<8x32xf32>
    %82 = vector.multi_reduction <add>, %81, %cst_17 [0] : vector<8x8x32xf32> to vector<8x32xf32>
    %83 = vector.broadcast %4 : vector<1x32xf32> to vector<8x32xf32>
    %84 = arith.addf %82, %83 : vector<8x32xf32>
    %cst_18 = arith.constant 1.41421354 : f32
    %85 = vector.broadcast %cst_18 : f32 to vector<8x32xf32>
    %86 = arith.mulf %1, %85 : vector<8x32xf32>
    %87 = arith.addf %84, %86 : vector<8x32xf32>
    %cst_19 = arith.constant dense<0.000000e+00> : vector<8xf32>
    %88 = vector.multi_reduction <add>, %87, %cst_19 [1] : vector<8x32xf32> to vector<8xf32>
    %89 = vector.shape_cast %88 : vector<8xf32> to vector<8x1xf32>
    %cst_20 = arith.constant 3.200000e+01 : f32
    %90 = vector.broadcast %cst_20 : f32 to vector<8x1xf32>
    %91 = arith.divf %89, %90 : vector<8x1xf32>
    %92 = vector.broadcast %91 : vector<8x1xf32> to vector<8x32xf32>
    %93 = arith.subf %87, %92 : vector<8x32xf32>
    %94 = arith.mulf %93, %93 : vector<8x32xf32>
    %cst_21 = arith.constant dense<0.000000e+00> : vector<8xf32>
    %95 = vector.multi_reduction <add>, %94, %cst_21 [1] : vector<8x32xf32> to vector<8xf32>
    %96 = vector.shape_cast %95 : vector<8xf32> to vector<8x1xf32>
    %cst_22 = arith.constant 3.200000e+01 : f32
    %97 = vector.broadcast %cst_22 : f32 to vector<8x1xf32>
    %98 = arith.divf %96, %97 : vector<8x1xf32>
    %99 = vector.broadcast %91 : vector<8x1xf32> to vector<8x32xf32>
    %100 = arith.subf %87, %99 : vector<8x32xf32>
    %cst_23 = arith.constant 9.99999974E-6 : f32
    %101 = vector.broadcast %cst_23 : f32 to vector<8x1xf32>
    %102 = arith.addf %98, %101 : vector<8x1xf32>
    %103 = math.rsqrt %102 : vector<8x1xf32>
    %104 = vector.broadcast %103 : vector<8x1xf32> to vector<8x32xf32>
    %105 = arith.mulf %100, %104 : vector<8x32xf32>
    %106 = vector.broadcast %5 : vector<1x32xf32> to vector<8x32xf32>
    %107 = arith.mulf %105, %106 : vector<8x32xf32>
    %108 = vector.broadcast %6 : vector<1x32xf32> to vector<8x32xf32>
    %109 = arith.addf %107, %108 : vector<8x32xf32>
    %c0_24 = arith.constant 0 : index
    %c0_25 = arith.constant 0 : index
    %c0_26 = arith.constant 0 : index
    %110 = vector.load %arg4[%c0_24, %c0_25, %c0_26] : memref<2x32x64xf32, #tpu.memory_space<vmem>>, vector<1x32x64xf32>
    %111 = vector.shape_cast %110 : vector<1x32x64xf32> to vector<32x64xf32>
    %cst_27 = arith.constant dense<0.000000e+00> : vector<8x64xf32>
    %112 = tpu.matmul %109, %111, %cst_27 {dimension_numbers = #tpu.dot_dimension_numbers<[1], [0], [0], [1], [0, 0, 1, 1], [], []>} : vector<8x32xf32>, vector<32x64xf32>, vector<8x64xf32> -> vector<8x64xf32>
    %113 = vector.broadcast %7 : vector<1x64xf32> to vector<8x64xf32>
    %114 = arith.addf %112, %113 : vector<8x64xf32>
    %cst_28 = arith.constant 0.000000e+00 : f32
    %115 = vector.broadcast %cst_28 : f32 to vector<8x64xf32>
    %116 = arith.maximumf %114, %115 : vector<8x64xf32>
    %c0_29 = arith.constant 0 : index
    %c0_30 = arith.constant 0 : index
    %c0_31 = arith.constant 0 : index
    %117 = vector.load %arg5[%c0_29, %c0_30, %c0_31] : memref<2x64x32xf32, #tpu.memory_space<vmem>>, vector<1x64x32xf32>
    %118 = vector.shape_cast %117 : vector<1x64x32xf32> to vector<64x32xf32>
    %cst_32 = arith.constant dense<0.000000e+00> : vector<8x32xf32>
    %119 = tpu.matmul %116, %118, %cst_32 {dimension_numbers = #tpu.dot_dimension_numbers<[1], [0], [0], [1], [0, 0, 1, 1], [], []>} : vector<8x64xf32>, vector<64x32xf32>, vector<8x32xf32> -> vector<8x32xf32>
    %120 = vector.broadcast %8 : vector<1x32xf32> to vector<8x32xf32>
    %121 = arith.addf %119, %120 : vector<8x32xf32>
    %cst_33 = arith.constant 1.41421354 : f32
    %122 = vector.broadcast %cst_33 : f32 to vector<8x32xf32>
    %123 = arith.mulf %109, %122 : vector<8x32xf32>
    %124 = arith.addf %121, %123 : vector<8x32xf32>
    %cst_34 = arith.constant dense<0.000000e+00> : vector<8xf32>
    %125 = vector.multi_reduction <add>, %124, %cst_34 [1] : vector<8x32xf32> to vector<8xf32>
    %126 = vector.shape_cast %125 : vector<8xf32> to vector<8x1xf32>
    %cst_35 = arith.constant 3.200000e+01 : f32
    %127 = vector.broadcast %cst_35 : f32 to vector<8x1xf32>
    %128 = arith.divf %126, %127 : vector<8x1xf32>
    %129 = vector.broadcast %128 : vector<8x1xf32> to vector<8x32xf32>
    %130 = arith.subf %124, %129 : vector<8x32xf32>
    %131 = arith.mulf %130, %130 : vector<8x32xf32>
    %cst_36 = arith.constant dense<0.000000e+00> : vector<8xf32>
    %132 = vector.multi_reduction <add>, %131, %cst_36 [1] : vector<8x32xf32> to vector<8xf32>
    %133 = vector.shape_cast %132 : vector<8xf32> to vector<8x1xf32>
    %cst_37 = arith.constant 3.200000e+01 : f32
    %134 = vector.broadcast %cst_37 : f32 to vector<8x1xf32>
    %135 = arith.divf %133, %134 : vector<8x1xf32>
    %136 = vector.broadcast %128 : vector<8x1xf32> to vector<8x32xf32>
    %137 = arith.subf %124, %136 : vector<8x32xf32>
    %cst_38 = arith.constant 9.99999974E-6 : f32
    %138 = vector.broadcast %cst_38 : f32 to vector<8x1xf32>
    %139 = arith.addf %135, %138 : vector<8x1xf32>
    %140 = math.rsqrt %139 : vector<8x1xf32>
    %141 = vector.broadcast %140 : vector<8x1xf32> to vector<8x32xf32>
    %142 = arith.mulf %137, %141 : vector<8x32xf32>
    %143 = vector.broadcast %9 : vector<1x32xf32> to vector<8x32xf32>
    %144 = arith.mulf %142, %143 : vector<8x32xf32>
    %145 = vector.broadcast %10 : vector<1x32xf32> to vector<8x32xf32>
    %146 = arith.addf %144, %145 : vector<8x32xf32>
    %c1 = arith.constant 1 : index
    %c0_39 = arith.constant 0 : index
    %c0_40 = arith.constant 0 : index
    %147 = vector.load %arg6[%c1, %c0_39, %c0_40] : memref<2x8x64xf32, #tpu.memory_space<vmem>>, vector<1x8x64xf32>
    %148 = vector.shape_cast %147 : vector<1x8x64xf32> to vector<8x64xf32>
    %149 = vector.extract_strided_slice %148 {offsets = [0, 0], sizes = [1, 32], strides = [1, 1]} : vector<8x64xf32> to vector<1x32xf32>
    %150 = vector.extract_strided_slice %148 {offsets = [1, 0], sizes = [1, 32], strides = [1, 1]} : vector<8x64xf32> to vector<1x32xf32>
    %151 = vector.extract_strided_slice %148 {offsets = [2, 0], sizes = [1, 32], strides = [1, 1]} : vector<8x64xf32> to vector<1x32xf32>
    %152 = vector.extract_strided_slice %148 {offsets = [3, 0], sizes = [1, 64], strides = [1, 1]} : vector<8x64xf32> to vector<1x64xf32>
    %153 = vector.extract_strided_slice %148 {offsets = [4, 0], sizes = [1, 32], strides = [1, 1]} : vector<8x64xf32> to vector<1x32xf32>
    %154 = vector.extract_strided_slice %148 {offsets = [5, 0], sizes = [1, 32], strides = [1, 1]} : vector<8x64xf32> to vector<1x32xf32>
    %155 = vector.extract_strided_slice %148 {offsets = [6, 0], sizes = [1, 32], strides = [1, 1]} : vector<8x64xf32> to vector<1x32xf32>
    %c1_41 = arith.constant 1 : index
    %c0_42 = arith.constant 0 : index
    %c0_43 = arith.constant 0 : index
    %156 = vector.load %arg2[%c1_41, %c0_42, %c0_43] : memref<2x32x96xf32, #tpu.memory_space<vmem>>, vector<1x32x96xf32>
    %157 = vector.shape_cast %156 : vector<1x32x96xf32> to vector<32x96xf32>
    %cst_44 = arith.constant dense<0.000000e+00> : vector<8x96xf32>
    %158 = tpu.matmul %146, %157, %cst_44 {dimension_numbers = #tpu.dot_dimension_numbers<[1], [0], [0], [1], [0, 0, 1, 1], [], []>} : vector<8x32xf32>, vector<32x96xf32>, vector<8x96xf32> -> vector<8x96xf32>
    %159 = vector.extract_strided_slice %158 {offsets = [0, 0], sizes = [8, 32], strides = [1, 1]} : vector<8x96xf32> to vector<8x32xf32>
    %160 = vector.extract_strided_slice %159 {offsets = [0, 0], sizes = [8, 4], strides = [1, 1]} : vector<8x32xf32> to vector<8x4xf32>
    %161 = vector.extract_strided_slice %159 {offsets = [0, 4], sizes = [8, 4], strides = [1, 1]} : vector<8x32xf32> to vector<8x4xf32>
    %162 = vector.extract_strided_slice %159 {offsets = [0, 8], sizes = [8, 4], strides = [1, 1]} : vector<8x32xf32> to vector<8x4xf32>
    %163 = vector.extract_strided_slice %159 {offsets = [0, 12], sizes = [8, 4], strides = [1, 1]} : vector<8x32xf32> to vector<8x4xf32>
    %164 = vector.extract_strided_slice %159 {offsets = [0, 16], sizes = [8, 4], strides = [1, 1]} : vector<8x32xf32> to vector<8x4xf32>
    %165 = vector.extract_strided_slice %159 {offsets = [0, 20], sizes = [8, 4], strides = [1, 1]} : vector<8x32xf32> to vector<8x4xf32>
    %166 = vector.extract_strided_slice %159 {offsets = [0, 24], sizes = [8, 4], strides = [1, 1]} : vector<8x32xf32> to vector<8x4xf32>
    %167 = vector.extract_strided_slice %159 {offsets = [0, 28], sizes = [8, 4], strides = [1, 1]} : vector<8x32xf32> to vector<8x4xf32>
    %168 = vector.shape_cast %160 : vector<8x4xf32> to vector<1x8x4xf32>
    %169 = vector.shape_cast %161 : vector<8x4xf32> to vector<1x8x4xf32>
    %170 = vector.shape_cast %162 : vector<8x4xf32> to vector<1x8x4xf32>
    %171 = vector.shape_cast %163 : vector<8x4xf32> to vector<1x8x4xf32>
    %172 = vector.shape_cast %164 : vector<8x4xf32> to vector<1x8x4xf32>
    %173 = vector.shape_cast %165 : vector<8x4xf32> to vector<1x8x4xf32>
    %174 = vector.shape_cast %166 : vector<8x4xf32> to vector<1x8x4xf32>
    %175 = vector.shape_cast %167 : vector<8x4xf32> to vector<1x8x4xf32>
    %176 = tpu.concatenate %168, %169, %170, %171, %172, %173, %174, %175 in 0 : vector<1x8x4xf32>, vector<1x8x4xf32>, vector<1x8x4xf32>, vector<1x8x4xf32>, vector<1x8x4xf32>, vector<1x8x4xf32>, vector<1x8x4xf32>, vector<1x8x4xf32> -> vector<8x8x4xf32>
    %177 = vector.extract_strided_slice %158 {offsets = [0, 32], sizes = [8, 32], strides = [1, 1]} : vector<8x96xf32> to vector<8x32xf32>
    %178 = vector.extract_strided_slice %177 {offsets = [0, 0], sizes = [8, 4], strides = [1, 1]} : vector<8x32xf32> to vector<8x4xf32>
    %179 = vector.extract_strided_slice %177 {offsets = [0, 4], sizes = [8, 4], strides = [1, 1]} : vector<8x32xf32> to vector<8x4xf32>
    %180 = vector.extract_strided_slice %177 {offsets = [0, 8], sizes = [8, 4], strides = [1, 1]} : vector<8x32xf32> to vector<8x4xf32>
    %181 = vector.extract_strided_slice %177 {offsets = [0, 12], sizes = [8, 4], strides = [1, 1]} : vector<8x32xf32> to vector<8x4xf32>
    %182 = vector.extract_strided_slice %177 {offsets = [0, 16], sizes = [8, 4], strides = [1, 1]} : vector<8x32xf32> to vector<8x4xf32>
    %183 = vector.extract_strided_slice %177 {offsets = [0, 20], sizes = [8, 4], strides = [1, 1]} : vector<8x32xf32> to vector<8x4xf32>
    %184 = vector.extract_strided_slice %177 {offsets = [0, 24], sizes = [8, 4], strides = [1, 1]} : vector<8x32xf32> to vector<8x4xf32>
    %185 = vector.extract_strided_slice %177 {offsets = [0, 28], sizes = [8, 4], strides = [1, 1]} : vector<8x32xf32> to vector<8x4xf32>
    %186 = vector.shape_cast %178 : vector<8x4xf32> to vector<1x8x4xf32>
    %187 = vector.shape_cast %179 : vector<8x4xf32> to vector<1x8x4xf32>
    %188 = vector.shape_cast %180 : vector<8x4xf32> to vector<1x8x4xf32>
    %189 = vector.shape_cast %181 : vector<8x4xf32> to vector<1x8x4xf32>
    %190 = vector.shape_cast %182 : vector<8x4xf32> to vector<1x8x4xf32>
    %191 = vector.shape_cast %183 : vector<8x4xf32> to vector<1x8x4xf32>
    %192 = vector.shape_cast %184 : vector<8x4xf32> to vector<1x8x4xf32>
    %193 = vector.shape_cast %185 : vector<8x4xf32> to vector<1x8x4xf32>
    %194 = tpu.concatenate %186, %187, %188, %189, %190, %191, %192, %193 in 0 : vector<1x8x4xf32>, vector<1x8x4xf32>, vector<1x8x4xf32>, vector<1x8x4xf32>, vector<1x8x4xf32>, vector<1x8x4xf32>, vector<1x8x4xf32>, vector<1x8x4xf32> -> vector<8x8x4xf32>
    %195 = vector.extract_strided_slice %158 {offsets = [0, 64], sizes = [8, 32], strides = [1, 1]} : vector<8x96xf32> to vector<8x32xf32>
    %196 = vector.extract_strided_slice %195 {offsets = [0, 0], sizes = [8, 4], strides = [1, 1]} : vector<8x32xf32> to vector<8x4xf32>
    %197 = vector.extract_strided_slice %195 {offsets = [0, 4], sizes = [8, 4], strides = [1, 1]} : vector<8x32xf32> to vector<8x4xf32>
    %198 = vector.extract_strided_slice %195 {offsets = [0, 8], sizes = [8, 4], strides = [1, 1]} : vector<8x32xf32> to vector<8x4xf32>
    %199 = vector.extract_strided_slice %195 {offsets = [0, 12], sizes = [8, 4], strides = [1, 1]} : vector<8x32xf32> to vector<8x4xf32>
    %200 = vector.extract_strided_slice %195 {offsets = [0, 16], sizes = [8, 4], strides = [1, 1]} : vector<8x32xf32> to vector<8x4xf32>
    %201 = vector.extract_strided_slice %195 {offsets = [0, 20], sizes = [8, 4], strides = [1, 1]} : vector<8x32xf32> to vector<8x4xf32>
    %202 = vector.extract_strided_slice %195 {offsets = [0, 24], sizes = [8, 4], strides = [1, 1]} : vector<8x32xf32> to vector<8x4xf32>
    %203 = vector.extract_strided_slice %195 {offsets = [0, 28], sizes = [8, 4], strides = [1, 1]} : vector<8x32xf32> to vector<8x4xf32>
    %204 = vector.shape_cast %196 : vector<8x4xf32> to vector<1x8x4xf32>
    %205 = vector.shape_cast %197 : vector<8x4xf32> to vector<1x8x4xf32>
    %206 = vector.shape_cast %198 : vector<8x4xf32> to vector<1x8x4xf32>
    %207 = vector.shape_cast %199 : vector<8x4xf32> to vector<1x8x4xf32>
    %208 = vector.shape_cast %200 : vector<8x4xf32> to vector<1x8x4xf32>
    %209 = vector.shape_cast %201 : vector<8x4xf32> to vector<1x8x4xf32>
    %210 = vector.shape_cast %202 : vector<8x4xf32> to vector<1x8x4xf32>
    %211 = vector.shape_cast %203 : vector<8x4xf32> to vector<1x8x4xf32>
    %212 = tpu.concatenate %204, %205, %206, %207, %208, %209, %210, %211 in 0 : vector<1x8x4xf32>, vector<1x8x4xf32>, vector<1x8x4xf32>, vector<1x8x4xf32>, vector<1x8x4xf32>, vector<1x8x4xf32>, vector<1x8x4xf32>, vector<1x8x4xf32> -> vector<8x8x4xf32>
    "tpu.trace_start"() <{level = 10 : i32, message = "hnd,hmd->hnm"}> : () -> ()
    %cst_45 = arith.constant dense<0.000000e+00> : vector<8x8x8xf32>
    %213 = tpu.matmul %176, %194, %cst_45 {dimension_numbers = #tpu.dot_dimension_numbers<[2], [2], [1], [1], [0, 0, 0, 1, 1, 1], [0], [0]>} : vector<8x8x4xf32>, vector<8x8x4xf32>, vector<8x8x8xf32> -> vector<8x8x8xf32>
    "tpu.trace_stop"() : () -> ()
    %cst_46 = arith.constant dense<0xFF800000> : vector<8x8xf32>
    %214 = vector.multi_reduction <maximumf>, %213, %cst_46 [2] : vector<8x8x8xf32> to vector<8x8xf32>
    %215 = vector.shape_cast %214 : vector<8x8xf32> to vector<8x8x1xf32>
    %216 = vector.broadcast %215 : vector<8x8x1xf32> to vector<8x8x8xf32>
    %217 = arith.subf %213, %216 : vector<8x8x8xf32>
    %218 = math.exp %217 : vector<8x8x8xf32>
    %cst_47 = arith.constant dense<0.000000e+00> : vector<8x8xf32>
    %219 = vector.multi_reduction <add>, %218, %cst_47 [2] : vector<8x8x8xf32> to vector<8x8xf32>
    %220 = vector.shape_cast %219 : vector<8x8xf32> to vector<8x8x1xf32>
    %221 = vector.broadcast %220 : vector<8x8x1xf32> to vector<8x8x8xf32>
    %222 = arith.divf %218, %221 : vector<8x8x8xf32>
    "tpu.trace_start"() <{level = 10 : i32, message = "hnm,hmd->hnd"}> : () -> ()
    %cst_48 = arith.constant dense<0.000000e+00> : vector<8x8x4xf32>
    %223 = tpu.matmul %222, %212, %cst_48 {dimension_numbers = #tpu.dot_dimension_numbers<[2], [1], [1], [2], [0, 0, 0, 1, 1, 2], [0], [0]>} : vector<8x8x8xf32>, vector<8x8x4xf32>, vector<8x8x4xf32> -> vector<8x8x4xf32>
    "tpu.trace_stop"() : () -> ()
    %c1_49 = arith.constant 1 : index
    %c0_50 = arith.constant 0 : index
    %c0_51 = arith.constant 0 : index
    %c0_52 = arith.constant 0 : index
    %224 = vector.load %arg3[%c1_49, %c0_50, %c0_51, %c0_52] : memref<2x8x4x32xf32, #tpu.memory_space<vmem>>, vector<1x8x4x32xf32>
    %225 = vector.shape_cast %224 : vector<1x8x4x32xf32> to vector<8x4x32xf32>
    "tpu.trace_start"() <{level = 10 : i32, message = "hnf,hfd->hnd"}> : () -> ()
    %cst_53 = arith.constant dense<0.000000e+00> : vector<8x8x32xf32>
    %226 = tpu.matmul %223, %225, %cst_53 {dimension_numbers = #tpu.dot_dimension_numbers<[2], [1], [1], [2], [0, 0, 0, 1, 1, 2], [0], [0]>} : vector<8x8x4xf32>, vector<8x4x32xf32>, vector<8x8x32xf32> -> vector<8x8x32xf32>
    "tpu.trace_stop"() : () -> ()
    %cst_54 = arith.constant dense<0.000000e+00> : vector<8x32xf32>
    %227 = vector.multi_reduction <add>, %226, %cst_54 [0] : vector<8x8x32xf32> to vector<8x32xf32>
    %228 = vector.broadcast %149 : vector<1x32xf32> to vector<8x32xf32>
    %229 = arith.addf %227, %228 : vector<8x32xf32>
    %cst_55 = arith.constant 1.41421354 : f32
    %230 = vector.broadcast %cst_55 : f32 to vector<8x32xf32>
    %231 = arith.mulf %146, %230 : vector<8x32xf32>
    %232 = arith.addf %229, %231 : vector<8x32xf32>
    %cst_56 = arith.constant dense<0.000000e+00> : vector<8xf32>
    %233 = vector.multi_reduction <add>, %232, %cst_56 [1] : vector<8x32xf32> to vector<8xf32>
    %234 = vector.shape_cast %233 : vector<8xf32> to vector<8x1xf32>
    %cst_57 = arith.constant 3.200000e+01 : f32
    %235 = vector.broadcast %cst_57 : f32 to vector<8x1xf32>
    %236 = arith.divf %234, %235 : vector<8x1xf32>
    %237 = vector.broadcast %236 : vector<8x1xf32> to vector<8x32xf32>
    %238 = arith.subf %232, %237 : vector<8x32xf32>
    %239 = arith.mulf %238, %238 : vector<8x32xf32>
    %cst_58 = arith.constant dense<0.000000e+00> : vector<8xf32>
    %240 = vector.multi_reduction <add>, %239, %cst_58 [1] : vector<8x32xf32> to vector<8xf32>
    %241 = vector.shape_cast %240 : vector<8xf32> to vector<8x1xf32>
    %cst_59 = arith.constant 3.200000e+01 : f32
    %242 = vector.broadcast %cst_59 : f32 to vector<8x1xf32>
    %243 = arith.divf %241, %242 : vector<8x1xf32>
    %244 = vector.broadcast %236 : vector<8x1xf32> to vector<8x32xf32>
    %245 = arith.subf %232, %244 : vector<8x32xf32>
    %cst_60 = arith.constant 9.99999974E-6 : f32
    %246 = vector.broadcast %cst_60 : f32 to vector<8x1xf32>
    %247 = arith.addf %243, %246 : vector<8x1xf32>
    %248 = math.rsqrt %247 : vector<8x1xf32>
    %249 = vector.broadcast %248 : vector<8x1xf32> to vector<8x32xf32>
    %250 = arith.mulf %245, %249 : vector<8x32xf32>
    %251 = vector.broadcast %150 : vector<1x32xf32> to vector<8x32xf32>
    %252 = arith.mulf %250, %251 : vector<8x32xf32>
    %253 = vector.broadcast %151 : vector<1x32xf32> to vector<8x32xf32>
    %254 = arith.addf %252, %253 : vector<8x32xf32>
    %c1_61 = arith.constant 1 : index
    %c0_62 = arith.constant 0 : index
    %c0_63 = arith.constant 0 : index
    %255 = vector.load %arg4[%c1_61, %c0_62, %c0_63] : memref<2x32x64xf32, #tpu.memory_space<vmem>>, vector<1x32x64xf32>
    %256 = vector.shape_cast %255 : vector<1x32x64xf32> to vector<32x64xf32>
    %cst_64 = arith.constant dense<0.000000e+00> : vector<8x64xf32>
    %257 = tpu.matmul %254, %256, %cst_64 {dimension_numbers = #tpu.dot_dimension_numbers<[1], [0], [0], [1], [0, 0, 1, 1], [], []>} : vector<8x32xf32>, vector<32x64xf32>, vector<8x64xf32> -> vector<8x64xf32>
    %258 = vector.broadcast %152 : vector<1x64xf32> to vector<8x64xf32>
    %259 = arith.addf %257, %258 : vector<8x64xf32>
    %cst_65 = arith.constant 0.000000e+00 : f32
    %260 = vector.broadcast %cst_65 : f32 to vector<8x64xf32>
    %261 = arith.maximumf %259, %260 : vector<8x64xf32>
    %c1_66 = arith.constant 1 : index
    %c0_67 = arith.constant 0 : index
    %c0_68 = arith.constant 0 : index
    %262 = vector.load %arg5[%c1_66, %c0_67, %c0_68] : memref<2x64x32xf32, #tpu.memory_space<vmem>>, vector<1x64x32xf32>
    %263 = vector.shape_cast %262 : vector<1x64x32xf32> to vector<64x32xf32>
    %cst_69 = arith.constant dense<0.000000e+00> : vector<8x32xf32>
    %264 = tpu.matmul %261, %263, %cst_69 {dimension_numbers = #tpu.dot_dimension_numbers<[1], [0], [0], [1], [0, 0, 1, 1], [], []>} : vector<8x64xf32>, vector<64x32xf32>, vector<8x32xf32> -> vector<8x32xf32>
    %265 = vector.broadcast %153 : vector<1x32xf32> to vector<8x32xf32>
    %266 = arith.addf %264, %265 : vector<8x32xf32>
    %cst_70 = arith.constant 1.41421354 : f32
    %267 = vector.broadcast %cst_70 : f32 to vector<8x32xf32>
    %268 = arith.mulf %254, %267 : vector<8x32xf32>
    %269 = arith.addf %266, %268 : vector<8x32xf32>
    %cst_71 = arith.constant dense<0.000000e+00> : vector<8xf32>
    %270 = vector.multi_reduction <add>, %269, %cst_71 [1] : vector<8x32xf32> to vector<8xf32>
    %271 = vector.shape_cast %270 : vector<8xf32> to vector<8x1xf32>
    %cst_72 = arith.constant 3.200000e+01 : f32
    %272 = vector.broadcast %cst_72 : f32 to vector<8x1xf32>
    %273 = arith.divf %271, %272 : vector<8x1xf32>
    %274 = vector.broadcast %273 : vector<8x1xf32> to vector<8x32xf32>
    %275 = arith.subf %269, %274 : vector<8x32xf32>
    %276 = arith.mulf %275, %275 : vector<8x32xf32>
    %cst_73 = arith.constant dense<0.000000e+00> : vector<8xf32>
    %277 = vector.multi_reduction <add>, %276, %cst_73 [1] : vector<8x32xf32> to vector<8xf32>
    %278 = vector.shape_cast %277 : vector<8xf32> to vector<8x1xf32>
    %cst_74 = arith.constant 3.200000e+01 : f32
    %279 = vector.broadcast %cst_74 : f32 to vector<8x1xf32>
    %280 = arith.divf %278, %279 : vector<8x1xf32>
    %281 = vector.broadcast %273 : vector<8x1xf32> to vector<8x32xf32>
    %282 = arith.subf %269, %281 : vector<8x32xf32>
    %cst_75 = arith.constant 9.99999974E-6 : f32
    %283 = vector.broadcast %cst_75 : f32 to vector<8x1xf32>
    %284 = arith.addf %280, %283 : vector<8x1xf32>
    %285 = math.rsqrt %284 : vector<8x1xf32>
    %286 = vector.broadcast %285 : vector<8x1xf32> to vector<8x32xf32>
    %287 = arith.mulf %282, %286 : vector<8x32xf32>
    %288 = vector.broadcast %154 : vector<1x32xf32> to vector<8x32xf32>
    %289 = arith.mulf %287, %288 : vector<8x32xf32>
    %290 = vector.broadcast %155 : vector<1x32xf32> to vector<8x32xf32>
    %291 = arith.addf %289, %290 : vector<8x32xf32>
    %c0_76 = arith.constant 0 : index
    %c0_77 = arith.constant 0 : index
    %c0_78 = arith.constant 0 : index
    %292 = vector.load %arg7[%c0_76, %c0_77, %c0_78] : memref<1x8x32xf32, #tpu.memory_space<vmem>>, vector<1x8x32xf32>
    %293 = vector.shape_cast %292 : vector<1x8x32xf32> to vector<8x32xf32>
    %294 = vector.shape_cast %291 : vector<8x32xf32> to vector<1x8x32xf32>
    tpu.vector_store %arg7[%c0_76, %c0_77, %c0_78], %294 {strides = array<i32>} : memref<1x8x32xf32, #tpu.memory_space<vmem>>, vector<1x8x32xf32>,
    return
  }
  func.func @transform_0(%arg0: i32) -> (i32, i32, i32) {
    %c0_i32 = arith.constant 0 : i32
    %c0_i32_0 = arith.constant 0 : i32
    %c0_i32_1 = arith.constant 0 : i32
    return %arg0, %c0_i32, %c0_i32_0 : i32, i32, i32
  }
  func.func @transform_1(%arg0: i32) -> (i32, i32, i32) {
    %c0_i32 = arith.constant 0 : i32
    %c0_i32_0 = arith.constant 0 : i32
    %c0_i32_1 = arith.constant 0 : i32
    %c0_i32_2 = arith.constant 0 : i32
    return %c0_i32, %c0_i32_0, %c0_i32_1 : i32, i32, i32
  }
  func.func @transform_2(%arg0: i32) -> (i32, i32, i32, i32) {
    %c0_i32 = arith.constant 0 : i32
    %c0_i32_0 = arith.constant 0 : i32
    %c0_i32_1 = arith.constant 0 : i32
    %c0_i32_2 = arith.constant 0 : i32
    %c0_i32_3 = arith.constant 0 : i32
    return %c0_i32, %c0_i32_0, %c0_i32_1, %c0_i32_2 : i32, i32, i32, i32
  }
  func.func @transform_3(%arg0: i32) -> (i32, i32, i32) {
    %c0_i32 = arith.constant 0 : i32
    %c0_i32_0 = arith.constant 0 : i32
    %c0_i32_1 = arith.constant 0 : i32
    %c0_i32_2 = arith.constant 0 : i32
    return %c0_i32, %c0_i32_0, %c0_i32_1 : i32, i32, i32
  }
  func.func @transform_4(%arg0: i32) -> (i32, i32, i32) {
    %c0_i32 = arith.constant 0 : i32
    %c0_i32_0 = arith.constant 0 : i32
    %c0_i32_1 = arith.constant 0 : i32
    %c0_i32_2 = arith.constant 0 : i32
    return %c0_i32, %c0_i32_0, %c0_i32_1 : i32, i32, i32
  }
  func.func @transform_5(%arg0: i32) -> (i32, i32, i32) {
    %c0_i32 = arith.constant 0 : i32
    %c0_i32_0 = arith.constant 0 : i32
    %c0_i32_1 = arith.constant 0 : i32
    %c0_i32_2 = arith.constant 0 : i32
    return %c0_i32, %c0_i32_0, %c0_i32_1 : i32, i32, i32
  }
  func.func @transform_6(%arg0: i32) -> (i32, i32, i32) {
    %c0_i32 = arith.constant 0 : i32
    %c0_i32_0 = arith.constant 0 : i32
    %c0_i32_1 = arith.constant 0 : i32
    return %arg0, %c0_i32, %c0_i32_0 : i32, i32, i32
  }
}

</mosaic_0001>

<llo_original>
// kernel: tpu_custom_call.1
$region0: #{tpu_custom_call.1}
  #allocation0 [shape = 'u32[]', space=smem, size = 0x4, offset = 0x4, fixed_abs, tag = 'smem constant byte address 0x4 - core index']
  #allocation1 [shape = 'u32[72,128]{1,0:T(1,128)}', space=vmem, size = 0x9000, scoped, tag = 'internal scratch']
  %s0 = inlined_call_operand.hbm [shape: f32[2,8,32], index: 0, kind: input, shape index: {}]
  %s1 = inlined_call_operand.vmem [shape: f32[2,32,96], index: 1, kind: input, shape index: {}]
  %s2 = inlined_call_operand.vmem [shape: f32[2,8,4,32], index: 2, kind: input, shape index: {}]
  %s3 = inlined_call_operand.vmem [shape: f32[2,32,64], index: 3, kind: input, shape index: {}]
  %s4 = inlined_call_operand.vmem [shape: f32[2,64,32], index: 4, kind: input, shape index: {}]
  %s5 = inlined_call_operand.hbm [shape: f32[2,8,64], index: 5, kind: input, shape index: {}]
  %s6 = inlined_call_operand.hbm [shape: f32[2,8,32], index: 6, kind: output, shape index: {}]
  %s7 = sld [smem:[#allocation0]]
  $region65: #{tpu_custom_call.1} parent=0
    _
  %s9 = ssub.s32 1, %s7
  %s10 = scalar_select 0, %s9, %s7
  $region1: #{tpu_custom_call.1} parent=0
    #allocation2 [shape = 'u8[8192]{0}', space=vmem, size = 0x2000, scoped, tag = 'input window, operand 0']
    #allocation3 [shape = 's32[2]{0}', space=sflag, size = 0x8, scoped, tag = 'scoped memory for tpu_custom_call.1']
    #allocation4 [shape = 's32[2]{0}', space=sflag, size = 0x8, scoped, tag = 'scoped memory for tpu_custom_call.1']
    #allocation5 [shape = 'u8[8192]{0}', space=vmem, size = 0x2000, scoped, tag = 'input window, operand 5, single buffered']
    #allocation6 [shape = 's32[1]{0}', space=sflag, size = 0x4, scoped, tag = 'scoped memory for tpu_custom_call.1']
    #allocation7 [shape = 'u8[8192]{0}', space=vmem, size = 0x2000, scoped, tag = 'output window, operand 0']
    %11 = vsyncpa [#allocation3], 0
    %s12 = scalar_lea.sflag [#allocation3], 1
    %13 = vsyncpa %s12, 0
    %14 = vsyncpa [#allocation6], 0
    %15 = vsyncpa [#allocation4], 0
    %s16 = scalar_lea.sflag [#allocation4], 1
    %17 = vsyncpa %s16, 0
    loop: start=0, step=1, limit=4
    $region2: #{tpu_custom_call.1} parent=1 // loop_pre_header
      _
    $region3: #{tpu_custom_call.1} parent=1 // loop_header
      %s19 = sphi 0, %s23
      %p20 = scmp.ge.s32.totalorder %s19, 4
      %s29 = sphi 0, %s31
      %s32 = sphi 0, %s29
      %s33 = sphi 0, %s32
      %s49 = sphi 0, %s33
      %s53 = sphi 0, %s53
      %s55 = sphi 0, %s53
      %s56 = sphi 0, %s55
      %s70 = sphi 0, %s56
      %s74 = sphi 0, %s74
      %s76 = sphi 0, %s74
      %s77 = sphi 0, %s76
      %s91 = sphi 0, %s77
      %s95 = sphi 0, %s95
      %s97 = sphi 0, %s95
      %s98 = sphi 0, %s97
      %s112 = sphi 0, %s98
      %s116 = sphi 0, %s116
      %s118 = sphi 0, %s116
      %s119 = sphi 0, %s118
      %s133 = sphi 0, %s119
      %s137 = sphi 0, %s137
      %s139 = sphi 0, %s137
      %s140 = sphi 0, %s139
      %s154 = sphi 0, %s140
      %s160 = sphi 0, %s162
      %s163 = sphi 0, %s160
      %s164 = sphi 0, %s163
      %s180 = sphi 0, %s164
    $region4: #{tpu_custom_call.1} parent=1 // loop_header_branch
      %22 = sbr.rel (%p20) target = $region8
    $region5: #{tpu_custom_call.1} parent=1 // loop_body
      %s24 = ssub.s32 %s19, 1
      %s25 = ssub.s32 %s19, 2
      %s26 = sadd.s32 %s19, 1
      %s27 = ssub.s32 %s19, %s26
      %p28 = scmp.eq.s32.totalorder %s27, 0
      %s30 = sadd.s32 %s29, 1
      %s31 = scalar_select %p28, %s29, %s30
      %p34 = pneg %p28
      %p35 = scmp.eq.s32.totalorder %s19, 1
      %p36 = por %p34, %p35
      %p37 = scmp.ne.s32.totalorder %s29, %s32
      %p38 = scmp.eq.s32.totalorder %s19, 0
      %p39 = por %p37, %p38
      %p40 = scmp.ne.s32.totalorder %s29, %s32
      %p41 = scmp.eq.s32.totalorder %s24, 1
      %p42 = por %p40, %p41
      %p43 = scmp.ne.s32.totalorder %s32, %s33
      %p44 = scmp.eq.s32.totalorder %s24, 0
      %p45 = por %p43, %p44
      %p46 = scmp.ne.s32.totalorder %s32, %s33
      %p47 = scmp.eq.s32.totalorder %s25, 1
      %p48 = por %p46, %p47
      %p50 = scmp.ne.s32.totalorder %s33, %s49
      %p51 = scmp.eq.s32.totalorder %s25, 0
      %p52 = por %p50, %p51
      %s54 = sadd.s32 %s53, 1
      %p57 = scmp.eq.s32.totalorder %s19, 1
      %p58 = scmp.ne.s32.totalorder %s53, %s55
      %p59 = scmp.eq.s32.totalorder %s19, 0
      %p60 = por %p58, %p59
      %p61 = scmp.ne.s32.totalorder %s53, %s55
      %p62 = scmp.eq.s32.totalorder %s24, 1
      %p63 = por %p61, %p62
      %p64 = scmp.ne.s32.totalorder %s55, %s56
      %p65 = scmp.eq.s32.totalorder %s24, 0
      %p66 = por %p64, %p65
      %p67 = scmp.ne.s32.totalorder %s55, %s56
      %p68 = scmp.eq.s32.totalorder %s25, 1
      %p69 = por %p67, %p68
      %p71 = scmp.ne.s32.totalorder %s56, %s70
      %p72 = scmp.eq.s32.totalorder %s25, 0
      %p73 = por %p71, %p72
      %s75 = sadd.s32 %s74, 1
      %p78 = scmp.eq.s32.totalorder %s19, 1
      %p79 = scmp.ne.s32.totalorder %s74, %s76
      %p80 = scmp.eq.s32.totalorder %s19, 0
      %p81 = por %p79, %p80
      %p82 = scmp.ne.s32.totalorder %s74, %s76
      %p83 = scmp.eq.s32.totalorder %s24, 1
      %p84 = por %p82, %p83
      %p85 = scmp.ne.s32.totalorder %s76, %s77
      %p86 = scmp.eq.s32.totalorder %s24, 0
      %p87 = por %p85, %p86
      %p88 = scmp.ne.s32.totalorder %s76, %s77
      %p89 = scmp.eq.s32.totalorder %s25, 1
      %p90 = por %p88, %p89
      %p92 = scmp.ne.s32.totalorder %s77, %s91
      %p93 = scmp.eq.s32.totalorder %s25, 0
      %p94 = por %p92, %p93
      %s96 = sadd.s32 %s95, 1
      %p99 = scmp.eq.s32.totalorder %s19, 1
      %p100 = scmp.ne.s32.totalorder %s95, %s97
      %p101 = scmp.eq.s32.totalorder %s19, 0
      %p102 = por %p100, %p101
      %p103 = scmp.ne.s32.totalorder %s95, %s97
      %p104 = scmp.eq.s32.totalorder %s24, 1
      %p105 = por %p103, %p104
      %p106 = scmp.ne.s32.totalorder %s97, %s98
      %p107 = scmp.eq.s32.totalorder %s24, 0
      %p108 = por %p106, %p107
      %p109 = scmp.ne.s32.totalorder %s97, %s98
      %p110 = scmp.eq.s32.totalorder %s25, 1
      %p111 = por %p109, %p110
      %p113 = scmp.ne.s32.totalorder %s98, %s112
      %p114 = scmp.eq.s32.totalorder %s25, 0
      %p115 = por %p113, %p114
      %s117 = sadd.s32 %s116, 1
      %p120 = scmp.eq.s32.totalorder %s19, 1
      %p121 = scmp.ne.s32.totalorder %s116, %s118
      %p122 = scmp.eq.s32.totalorder %s19, 0
      %p123 = por %p121, %p122
      %p124 = scmp.ne.s32.totalorder %s116, %s118
      %p125 = scmp.eq.s32.totalorder %s24, 1
      %p126 = por %p124, %p125
      %p127 = scmp.ne.s32.totalorder %s118, %s119
      %p128 = scmp.eq.s32.totalorder %s24, 0
      %p129 = por %p127, %p128
      %p130 = scmp.ne.s32.totalorder %s118, %s119
      %p131 = scmp.eq.s32.totalorder %s25, 1
      %p132 = por %p130, %p131
      %p134 = scmp.ne.s32.totalorder %s119, %s133
      %p135 = scmp.eq.s32.totalorder %s25, 0
      %p136 = por %p134, %p135
      %s138 = sadd.s32 %s137, 1
      %p141 = scmp.eq.s32.totalorder %s19, 1
      %p142 = scmp.ne.s32.totalorder %s137, %s139
      %p143 = scmp.eq.s32.totalorder %s19, 0
      %p144 = por %p142, %p143
      %p145 = scmp.ne.s32.totalorder %s137, %s139
      %p146 = scmp.eq.s32.totalorder %s24, 1
      %p147 = por %p145, %p146
      %p148 = scmp.ne.s32.totalorder %s139, %s140
      %p149 = scmp.eq.s32.totalorder %s24, 0
      %p150 = por %p148, %p149
      %p151 = scmp.ne.s32.totalorder %s139, %s140
      %p152 = scmp.eq.s32.totalorder %s25, 1
      %p153 = por %p151, %p152
      %p155 = scmp.ne.s32.totalorder %s140, %s154
      %p156 = scmp.eq.s32.totalorder %s25, 0
      %p157 = por %p155, %p156
      %s158 = ssub.s32 %s19, %s26
      %p159 = scmp.eq.s32.totalorder %s158, 0
      %s161 = sadd.s32 %s160, 1
      %s162 = scalar_select %p159, %s160, %s161
      %p165 = pneg %p159
      %p166 = scmp.eq.s32.totalorder %s19, 1
      %p167 = por %p165, %p166
      %p168 = scmp.ne.s32.totalorder %s160, %s163
      %p169 = scmp.eq.s32.totalorder %s19, 0
      %p170 = por %p168, %p169
      %p171 = scmp.ne.s32.totalorder %s160, %s163
      %p172 = scmp.eq.s32.totalorder %s24, 1
      %p173 = por %p171, %p172
      %p174 = scmp.ne.s32.totalorder %s163, %s164
      %p175 = scmp.eq.s32.totalorder %s24, 0
      %p176 = por %p174, %p175
      %p177 = scmp.ne.s32.totalorder %s163, %s164
      %p178 = scmp.eq.s32.totalorder %s25, 1
      %p179 = por %p177, %p178
      %p181 = scmp.ne.s32.totalorder %s164, %s180
      %p182 = scmp.eq.s32.totalorder %s25, 0
      %p183 = por %p181, %p182
      %p184 = scmp.le.s32.totalorder 1, %s19
      %p185 = scmp.lt.s32.totalorder %s19, 3
      %p186 = pnand %p184, %p185
      %p187 = pneg %p186
      // Predicated region
      $region9: #{tpu_custom_call.1} parent=5 // pred_check
        _
      $region10: #{tpu_custom_call.1} parent=5 // pred_check_branch
        %189 = sbr.rel (%p186) target = $region12
      $region11: #{tpu_custom_call.1} parent=5 // pred_region
        %s190 = ssub.s32 %s19, 1
        // Predicated region
        $region13: #{tpu_custom_call.1} parent=11 // pred_check
          %p191 = pneg %p66
        $region14: #{tpu_custom_call.1} parent=11 // pred_check_branch
          %193 = sbr.rel (%p191) target = $region16
        $region15: #{tpu_custom_call.1} parent=11 // pred_region
          _
        $region16: #{tpu_custom_call.1} parent=11 // pred_fallthru
          _
        // Predicated region
        $region17: #{tpu_custom_call.1} parent=11 // pred_check
          %p194 = pneg %p87
        $region18: #{tpu_custom_call.1} parent=11 // pred_check_branch
          %196 = sbr.rel (%p194) target = $region20
        $region19: #{tpu_custom_call.1} parent=11 // pred_region
          _
        $region20: #{tpu_custom_call.1} parent=11 // pred_fallthru
          _
        // Predicated region
        $region21: #{tpu_custom_call.1} parent=11 // pred_check
          %p197 = pneg %p108
        $region22: #{tpu_custom_call.1} parent=11 // pred_check_branch
          %199 = sbr.rel (%p197) target = $region24
        $region23: #{tpu_custom_call.1} parent=11 // pred_region
          _
        $region24: #{tpu_custom_call.1} parent=11 // pred_fallthru
          _
        // Predicated region
        $region25: #{tpu_custom_call.1} parent=11 // pred_check
          %p200 = pneg %p129
        $region26: #{tpu_custom_call.1} parent=11 // pred_check_branch
          %202 = sbr.rel (%p200) target = $region28
        $region27: #{tpu_custom_call.1} parent=11 // pred_region
          _
        $region28: #{tpu_custom_call.1} parent=11 // pred_fallthru
          _
        // Predicated region
        $region29: #{tpu_custom_call.1} parent=11 // pred_check
          %p203 = pneg %p150
        $region30: #{tpu_custom_call.1} parent=11 // pred_check_branch
          %205 = sbr.rel (%p203) target = $region32
        $region31: #{tpu_custom_call.1} parent=11 // pred_region
          %207 = vsyncadd [#allocation6], 0
          %s208 = sshll.u32 %s5, 4
          %s209 = int_to_ptr.hbm [resolvable:$true] %s208
          %s210 = sshll.u32 [#allocation5], 4
          %s211 = int_to_ptr.vmem [resolvable:$true] %s210
          %216 = dma.hbm_to_vmem [thread:$0]  %s209, 256, %s211, [#allocation6], 128, 128, 8
        $region32: #{tpu_custom_call.1} parent=11 // pred_fallthru
          _
      $region12: #{tpu_custom_call.1} parent=5 // pred_fallthru
        _
      %p217 = scmp.lt.s32.totalorder %s19, 2
      // Predicated region
      $region33: #{tpu_custom_call.1} parent=5 // pred_check
        %p218 = pneg %p217
      $region34: #{tpu_custom_call.1} parent=5 // pred_check_branch
        %220 = sbr.rel (%p218) target = $region36
      $region35: #{tpu_custom_call.1} parent=5 // pred_region
        // Predicated region
        $region37: #{tpu_custom_call.1} parent=35 // pred_check
          %p221 = pneg %p39
        $region38: #{tpu_custom_call.1} parent=35 // pred_check_branch
          %223 = sbr.rel (%p221) target = $region40
        $region39: #{tpu_custom_call.1} parent=35 // pred_region
          %s224 = sand.u32 %s29, 1
          %s225 = scalar_lea.sflag [#allocation3], %s224
          %s226 = sand.u32 %s29, 1
          %s227 = smul.addr %s226, 8
          %s228 = scalar_lea.vmem [#allocation2], %s227
          %230 = vsyncadd %s225, 0
          %s231 = smul.addr %s19, 8
          %s232 = scalar_lea.hbm %s0, %s231
          %s234 = sshll.u32 %s232, 4
          %s235 = int_to_ptr.hbm [resolvable:$true] %s234
          %s236 = sshll.u32 %s228, 4
          %s237 = int_to_ptr.vmem [resolvable:$true] %s236
          %239 = dma.hbm_to_vmem [thread:$0]  %s235, 128, %s237, %s225
        $region40: #{tpu_custom_call.1} parent=35 // pred_fallthru
          _
      $region36: #{tpu_custom_call.1} parent=5 // pred_fallthru
        _
      %p240 = scmp.le.s32.totalorder 1, %s19
      %p241 = scmp.lt.s32.totalorder %s19, 3
      %p242 = pnand %p240, %p241
      %p243 = pneg %p242
      // Predicated region
      $region41: #{tpu_custom_call.1} parent=5 // pred_check
        _
      $region42: #{tpu_custom_call.1} parent=5 // pred_check_branch
        %245 = sbr.rel (%p242) target = $region44
      $region43: #{tpu_custom_call.1} parent=5 // pred_region
        %s246 = ssub.s32 %s19, 1
        %s247 = sand.u32 %s32, 1
        %s248 = scalar_lea.sflag [#allocation3], %s247
        %s249 = sand.u32 %s32, 1
        %s250 = smul.addr %s249, 8
        %s251 = scalar_lea.vmem [#allocation2], %s250
        // Predicated region
        $region45: #{tpu_custom_call.1} parent=43 // pred_check
          %p252 = pneg %p45
        $region46: #{tpu_custom_call.1} parent=43 // pred_check_branch
          %254 = sbr.rel (%p252) target = $region48
        $region47: #{tpu_custom_call.1} parent=43 // pred_region
          %256 = dma.done %s248, 128
        $region48: #{tpu_custom_call.1} parent=43 // pred_fallthru
          _
        // Predicated region
        $region49: #{tpu_custom_call.1} parent=43 // pred_check
          %p257 = pneg %p150
        $region50: #{tpu_custom_call.1} parent=43 // pred_check_branch
          %259 = sbr.rel (%p257) target = $region52
        $region51: #{tpu_custom_call.1} parent=43 // pred_region
          %261 = dma.done [#allocation6], 256
        $region52: #{tpu_custom_call.1} parent=43 // pred_fallthru
          _
        %s262 = sand.u32 %s32, 1
        %s263 = scalar_lea.sflag [#allocation3], %s262
        %s264 = sand.u32 %s32, 1
        %s265 = smul.addr %s264, 8
        %s266 = scalar_lea.vmem [#allocation2], %s265
        %p267 = pneg %p45
        %p268 = pneg %p42
        %p269 = pneg %p66
        %p270 = pneg %p63
        %p271 = pneg %p87
        %p272 = pneg %p84
        %p273 = pneg %p108
        %p274 = pneg %p105
        %p275 = pneg %p129
        %p276 = pneg %p126
        %p277 = pneg %p150
        %p278 = pneg %p147
        %p279 = pneg %p176
        %p280 = pneg %p173
        %s281 = sand.u32 %s163, 1
        %s282 = scalar_lea.sflag [#allocation4], %s281
        %s283 = sand.u32 %s163, 1
        %s284 = smul.addr %s283, 8
        %s285 = scalar_lea.vmem [#allocation7], %s284
        %v286 = vld [vmem:[%s251] sm:$0xff]
        %v287 = vld [vmem:[#allocation5] sm:$0xff]
        %v288 = vld [vmem:[%s1] sm:$0xff]
        %v289 = vld [vmem:[%s1 + $0x8] sm:$0xff]
        %v290 = vld [vmem:[%s1 + $0x10] sm:$0xff]
        %v291 = vld [vmem:[%s1 + $0x18] sm:$0xff]
        %vm292 = vcmask 261120
        %v294 = vsel %vm292, %v286, 0
        %296 = vmatpush.msra.mxu0 0.0
        %297 = vmatpush.msra.mxu0 0.0
        %298 = vmatpush.msra.mxu0 0.0
        %299 = vmatpush.msra.mxu0 0.0
        %300 = vmatpush.msra.mxu0 0.0
        %301 = vmatpush.msra.mxu0 0.0
        %302 = vmatpush.msra.mxu0 0.0
        %303 = vmatpush.msra.mxu0 0.0
        %304 = vmatpush.msra.mxu0 0.0
        %305 = vmatpush.msra.mxu0 0.0
        %306 = vmatpush.msra.mxu0 0.0
        %307 = vmatpush.msra.mxu0 0.0
        %308 = vmatpush.msra.mxu0 %v291
        %309 = vmatpush.msra.mxu0 %v290
        %310 = vmatpush.msra.mxu0 %v289
        %311 = vmatpush.msra.mxu0 %v288
        %312 = vmatmul.f32.gmra.mxu0 %v294
        %v313 = vpop.f32.mrf.mxu0
        %v314 = vadd.f32 0.0, %v313
        %315 = vdwg.mxu0
        %317 = vrot.lane.b32.xlu0 %v314, 124
        %v318 = vpop.permute.xlu0 %317
        %319 = vrot.lane.b32.xlu0 %v314, 120
        %v320 = vpop.permute.xlu0 %319
        %321 = vrot.lane.b32.xlu0 %v314, 116
        %v322 = vpop.permute.xlu0 %321
        %323 = vrot.lane.b32.xlu0 %v314, 112
        %v324 = vpop.permute.xlu0 %323
        %325 = vrot.lane.b32.xlu0 %v314, 108
        %v326 = vpop.permute.xlu0 %325
        %327 = vrot.lane.b32.xlu0 %v314, 104
        %v328 = vpop.permute.xlu0 %327
        %329 = vrot.lane.b32.xlu0 %v314, 100
        %v330 = vpop.permute.xlu0 %329
        %331 = vrot.lane.b32.xlu0 %v314, 96
        %v332 = vpop.permute.xlu0 %331
        %vm333 = vcmask 31744
        %v334 = vsel %vm333, %v314, 0
        %v336 = vsel %vm333, %v332, 0
        %338 = vmatpush.xpose.msra.mxu0 0.0
        %339 = vmatpush.xpose.msra.mxu0 0.0
        %340 = vmatpush.xpose.msra.mxu0 0.0
        %341 = vmatpush.xpose.msra.mxu0 0.0
        %342 = vmatpush.xpose.msra.mxu0 0.0
        %343 = vmatpush.xpose.msra.mxu0 0.0
        %344 = vmatpush.xpose.msra.mxu0 0.0
        %345 = vmatpush.xpose.msra.mxu0 0.0
        %346 = vmatpush.xpose.msra.mxu0 0.0
        %347 = vmatpush.xpose.msra.mxu0 0.0
        %348 = vmatpush.xpose.msra.mxu0 0.0
        %349 = vmatpush.xpose.msra.mxu0 0.0
        %350 = vmatpush.xpose.msra.mxu0 0.0
        %351 = vmatpush.xpose.msra.mxu0 0.0
        %352 = vmatpush.xpose.msra.mxu0 0.0
        %353 = vmatpush.xpose.msra.mxu0 %v336
        %354 = vmatmul.f32.gmra.mxu0 %v334
        %v355 = vpop.f32.mrf.mxu0
        %v356 = vadd.f32 0.0, %v355
        %357 = vdwg.mxu0
        %358 = vrot.lane.b32.xlu0 %v318, 96
        %v359 = vpop.permute.xlu0 %358
        %v360 = vsel %vm333, %v318, 0
        %v362 = vsel %vm333, %v359, 0
        %364 = vmatpush.xpose.msra.mxu0 0.0
        %365 = vmatpush.xpose.msra.mxu0 0.0
        %366 = vmatpush.xpose.msra.mxu0 0.0
        %367 = vmatpush.xpose.msra.mxu0 0.0
        %368 = vmatpush.xpose.msra.mxu0 0.0
        %369 = vmatpush.xpose.msra.mxu0 0.0
        %370 = vmatpush.xpose.msra.mxu0 0.0
        %371 = vmatpush.xpose.msra.mxu0 0.0
        %372 = vmatpush.xpose.msra.mxu0 0.0
        %373 = vmatpush.xpose.msra.mxu0 0.0
        %374 = vmatpush.xpose.msra.mxu0 0.0
        %375 = vmatpush.xpose.msra.mxu0 0.0
        %376 = vmatpush.xpose.msra.mxu0 0.0
        %377 = vmatpush.xpose.msra.mxu0 0.0
        %378 = vmatpush.xpose.msra.mxu0 0.0
        %379 = vmatpush.xpose.msra.mxu0 %v362
        %380 = vmatmul.f32.gmra.mxu0 %v360
        %v381 = vpop.f32.mrf.mxu0
        %v382 = vadd.f32 0.0, %v381
        %383 = vdwg.mxu0
        %384 = vrot.lane.b32.xlu0 %v320, 96
        %v385 = vpop.permute.xlu0 %384
        %v386 = vsel %vm333, %v320, 0
        %v388 = vsel %vm333, %v385, 0
        %390 = vmatpush.xpose.msra.mxu0 0.0
        %391 = vmatpush.xpose.msra.mxu0 0.0
        %392 = vmatpush.xpose.msra.mxu0 0.0
        %393 = vmatpush.xpose.msra.mxu0 0.0
        %394 = vmatpush.xpose.msra.mxu0 0.0
        %395 = vmatpush.xpose.msra.mxu0 0.0
        %396 = vmatpush.xpose.msra.mxu0 0.0
        %397 = vmatpush.xpose.msra.mxu0 0.0
        %398 = vmatpush.xpose.msra.mxu0 0.0
        %399 = vmatpush.xpose.msra.mxu0 0.0
        %400 = vmatpush.xpose.msra.mxu0 0.0
        %401 = vmatpush.xpose.msra.mxu0 0.0
        %402 = vmatpush.xpose.msra.mxu0 0.0
        %403 = vmatpush.xpose.msra.mxu0 0.0
        %404 = vmatpush.xpose.msra.mxu0 0.0
        %405 = vmatpush.xpose.msra.mxu0 %v388
        %406 = vmatmul.f32.gmra.mxu0 %v386
        %v407 = vpop.f32.mrf.mxu0
        %v408 = vadd.f32 0.0, %v407
        %409 = vdwg.mxu0
        %410 = vrot.lane.b32.xlu0 %v322, 96
        %v411 = vpop.permute.xlu0 %410
        %v412 = vsel %vm333, %v322, 0
        %v414 = vsel %vm333, %v411, 0
        %416 = vmatpush.xpose.msra.mxu0 0.0
        %417 = vmatpush.xpose.msra.mxu0 0.0
        %418 = vmatpush.xpose.msra.mxu0 0.0
        %419 = vmatpush.xpose.msra.mxu0 0.0
        %420 = vmatpush.xpose.msra.mxu0 0.0
        %421 = vmatpush.xpose.msra.mxu0 0.0
        %422 = vmatpush.xpose.msra.mxu0 0.0
        %423 = vmatpush.xpose.msra.mxu0 0.0
        %424 = vmatpush.xpose.msra.mxu0 0.0
        %425 = vmatpush.xpose.msra.mxu0 0.0
        %426 = vmatpush.xpose.msra.mxu0 0.0
        %427 = vmatpush.xpose.msra.mxu0 0.0
        %428 = vmatpush.xpose.msra.mxu0 0.0
        %429 = vmatpush.xpose.msra.mxu0 0.0
        %430 = vmatpush.xpose.msra.mxu0 0.0
        %431 = vmatpush.xpose.msra.mxu0 %v414
        %432 = vmatmul.f32.gmra.mxu0 %v412
        %v433 = vpop.f32.mrf.mxu0
        %v434 = vadd.f32 0.0, %v433
        %435 = vdwg.mxu0
        %436 = vrot.lane.b32.xlu0 %v324, 96
        %v437 = vpop.permute.xlu0 %436
        %v438 = vsel %vm333, %v324, 0
        %v440 = vsel %vm333, %v437, 0
        %442 = vmatpush.xpose.msra.mxu0 0.0
        %443 = vmatpush.xpose.msra.mxu0 0.0
        %444 = vmatpush.xpose.msra.mxu0 0.0
        %445 = vmatpush.xpose.msra.mxu0 0.0
        %446 = vmatpush.xpose.msra.mxu0 0.0
        %447 = vmatpush.xpose.msra.mxu0 0.0
        %448 = vmatpush.xpose.msra.mxu0 0.0
        %449 = vmatpush.xpose.msra.mxu0 0.0
        %450 = vmatpush.xpose.msra.mxu0 0.0
        %451 = vmatpush.xpose.msra.mxu0 0.0
        %452 = vmatpush.xpose.msra.mxu0 0.0
        %453 = vmatpush.xpose.msra.mxu0 0.0
        %454 = vmatpush.xpose.msra.mxu0 0.0
        %455 = vmatpush.xpose.msra.mxu0 0.0
        %456 = vmatpush.xpose.msra.mxu0 0.0
        %457 = vmatpush.xpose.msra.mxu0 %v440
        %458 = vmatmul.f32.gmra.mxu0 %v438
        %v459 = vpop.f32.mrf.mxu0
        %v460 = vadd.f32 0.0, %v459
        %461 = vdwg.mxu0
        %462 = vrot.lane.b32.xlu0 %v326, 96
        %v463 = vpop.permute.xlu0 %462
        %v464 = vsel %vm333, %v326, 0
        %v466 = vsel %vm333, %v463, 0
        %468 = vmatpush.xpose.msra.mxu0 0.0
        %469 = vmatpush.xpose.msra.mxu0 0.0
        %470 = vmatpush.xpose.msra.mxu0 0.0
        %471 = vmatpush.xpose.msra.mxu0 0.0
        %472 = vmatpush.xpose.msra.mxu0 0.0
        %473 = vmatpush.xpose.msra.mxu0 0.0
        %474 = vmatpush.xpose.msra.mxu0 0.0
        %475 = vmatpush.xpose.msra.mxu0 0.0
        %476 = vmatpush.xpose.msra.mxu0 0.0
        %477 = vmatpush.xpose.msra.mxu0 0.0
        %478 = vmatpush.xpose.msra.mxu0 0.0
        %479 = vmatpush.xpose.msra.mxu0 0.0
        %480 = vmatpush.xpose.msra.mxu0 0.0
        %481 = vmatpush.xpose.msra.mxu0 0.0
        %482 = vmatpush.xpose.msra.mxu0 0.0
        %483 = vmatpush.xpose.msra.mxu0 %v466
        %484 = vmatmul.f32.gmra.mxu0 %v464
        %v485 = vpop.f32.mrf.mxu0
        %v486 = vadd.f32 0.0, %v485
        %487 = vdwg.mxu0
        %488 = vrot.lane.b32.xlu0 %v328, 96
        %v489 = vpop.permute.xlu0 %488
        %v490 = vsel %vm333, %v328, 0
        %v492 = vsel %vm333, %v489, 0
        %494 = vmatpush.xpose.msra.mxu0 0.0
        %495 = vmatpush.xpose.msra.mxu0 0.0
        %496 = vmatpush.xpose.msra.mxu0 0.0
        %497 = vmatpush.xpose.msra.mxu0 0.0
        %498 = vmatpush.xpose.msra.mxu0 0.0
        %499 = vmatpush.xpose.msra.mxu0 0.0
        %500 = vmatpush.xpose.msra.mxu0 0.0
        %501 = vmatpush.xpose.msra.mxu0 0.0
        %502 = vmatpush.xpose.msra.mxu0 0.0
        %503 = vmatpush.xpose.msra.mxu0 0.0
        %504 = vmatpush.xpose.msra.mxu0 0.0
        %505 = vmatpush.xpose.msra.mxu0 0.0
        %506 = vmatpush.xpose.msra.mxu0 0.0
        %507 = vmatpush.xpose.msra.mxu0 0.0
        %508 = vmatpush.xpose.msra.mxu0 0.0
        %509 = vmatpush.xpose.msra.mxu0 %v492
        %510 = vmatmul.f32.gmra.mxu0 %v490
        %v511 = vpop.f32.mrf.mxu0
        %v512 = vadd.f32 0.0, %v511
        %513 = vdwg.mxu0
        %514 = vrot.lane.b32.xlu0 %v330, 96
        %v515 = vpop.permute.xlu0 %514
        %v516 = vsel %vm333, %v330, 0
        %v518 = vsel %vm333, %v515, 0
        %520 = vmatpush.xpose.msra.mxu0 0.0
        %521 = vmatpush.xpose.msra.mxu0 0.0
        %522 = vmatpush.xpose.msra.mxu0 0.0
        %523 = vmatpush.xpose.msra.mxu0 0.0
        %524 = vmatpush.xpose.msra.mxu0 0.0
        %525 = vmatpush.xpose.msra.mxu0 0.0
        %526 = vmatpush.xpose.msra.mxu0 0.0
        %527 = vmatpush.xpose.msra.mxu0 0.0
        %528 = vmatpush.xpose.msra.mxu0 0.0
        %529 = vmatpush.xpose.msra.mxu0 0.0
        %530 = vmatpush.xpose.msra.mxu0 0.0
        %531 = vmatpush.xpose.msra.mxu0 0.0
        %532 = vmatpush.xpose.msra.mxu0 0.0
        %533 = vmatpush.xpose.msra.mxu0 0.0
        %534 = vmatpush.xpose.msra.mxu0 0.0
        %535 = vmatpush.xpose.msra.mxu0 %v518
        %536 = vmatmul.f32.gmra.mxu0 %v516
        %v537 = vpop.f32.mrf.mxu0
        %v538 = vadd.f32 0.0, %v537
        %539 = vdwg.mxu0
        %vm540 = vcmask 64512
        %v541 = vsel %vm540, %v356, -inf
        %542 = vmax.xlane.f32.xlu0 %v541
        %v543 = vpop.xlane.xlu0 %542
        %v544 = vsel %vm540, %v382, -inf
        %545 = vmax.xlane.f32.xlu0 %v544
        %v546 = vpop.xlane.xlu0 %545
        %v547 = vsel %vm540, %v408, -inf
        %548 = vmax.xlane.f32.xlu0 %v547
        %v549 = vpop.xlane.xlu0 %548
        %v550 = vsel %vm540, %v434, -inf
        %551 = vmax.xlane.f32.xlu0 %v550
        %v552 = vpop.xlane.xlu0 %551
        %v553 = vsel %vm540, %v460, -inf
        %554 = vmax.xlane.f32.xlu0 %v553
        %v555 = vpop.xlane.xlu0 %554
        %v556 = vsel %vm540, %v486, -inf
        %557 = vmax.xlane.f32.xlu0 %v556
        %v558 = vpop.xlane.xlu0 %557
        %v559 = vsel %vm540, %v512, -inf
        %560 = vmax.xlane.f32.xlu0 %v559
        %v561 = vpop.xlane.xlu0 %560
        %v562 = vsel %vm540, %v538, -inf
        %563 = vmax.xlane.f32.xlu0 %v562
        %v564 = vpop.xlane.xlu0 %563
        %v565 = vsub.f32 %v356, %v543
        %v566 = vsub.f32 %v382, %v546
        %v567 = vsub.f32 %v408, %v549
        %v568 = vsub.f32 %v434, %v552
        %v569 = vsub.f32 %v460, %v555
        %v570 = vsub.f32 %v486, %v558
        %v571 = vsub.f32 %v512, %v561
        %v572 = vsub.f32 %v538, %v564
        %v573 = vmul.f32 %v565, 1.442695
        %v574 = vpow.pop %v573
        %v575 = vmul.f32 %v566, 1.442695
        %v576 = vpow.pop %v575
        %v577 = vmul.f32 %v567, 1.442695
        %v578 = vpow.pop %v577
        %v579 = vmul.f32 %v568, 1.442695
        %v580 = vpow.pop %v579
        %v581 = vmul.f32 %v569, 1.442695
        %v582 = vpow.pop %v581
        %v583 = vmul.f32 %v570, 1.442695
        %v584 = vpow.pop %v583
        %v585 = vmul.f32 %v571, 1.442695
        %v586 = vpow.pop %v585
        %v587 = vmul.f32 %v572, 1.442695
        %v588 = vpow.pop %v587
        %v589 = vsel %vm540, %v574, 0.0
        %590 = vadd.xlane.f32.xlu0 %v589
        %v591 = vpop.xlane.xlu0 %590
        %v592 = vsel %vm540, %v576, 0.0
        %593 = vadd.xlane.f32.xlu0 %v592
        %v594 = vpop.xlane.xlu0 %593
        %v595 = vsel %vm540, %v578, 0.0
        %596 = vadd.xlane.f32.xlu0 %v595
        %v597 = vpop.xlane.xlu0 %596
        %v598 = vsel %vm540, %v580, 0.0
        %599 = vadd.xlane.f32.xlu0 %v598
        %v600 = vpop.xlane.xlu0 %599
        %v601 = vsel %vm540, %v582, 0.0
        %602 = vadd.xlane.f32.xlu0 %v601
        %v603 = vpop.xlane.xlu0 %602
        %v604 = vsel %vm540, %v584, 0.0
        %605 = vadd.xlane.f32.xlu0 %v604
        %v606 = vpop.xlane.xlu0 %605
        %v607 = vsel %vm540, %v586, 0.0
        %608 = vadd.xlane.f32.xlu0 %v607
        %v609 = vpop.xlane.xlu0 %608
        %v610 = vsel %vm540, %v588, 0.0
        %611 = vadd.xlane.f32.xlu0 %v610
        %v612 = vpop.xlane.xlu0 %611
        %v613 = vrcp.pop %v591
        %v614 = vmul.f32 %v591, %v613
        %v615 = vsub.f32 1.0, %v614
        %v616 = vmul.f32 %v613, %v615
        %v617 = vadd.f32 %v613, %v616
        %vm618 = vweird.f32 %v591
        %vm619 = vweird.f32 %v613
        %vm620 = vmor %vm618, %vm619
        %v621 = vsel %vm620, %v613, %v617
        %v622 = vand.u32 2147483647, %v591
        %vm623 = vcmp.eq.f32.partialorder %v622, 8.507059e+37
        %v624 = vand.u32 %v591, 2147483648
        %v625 = vor.u32 1.1754944e-38, %v624
        %v626 = vsel %vm623, %v625, %v621
        %v627 = vmul.f32 %v574, %v626
        %v628 = vrcp.pop %v594
        %v629 = vmul.f32 %v594, %v628
        %v630 = vsub.f32 1.0, %v629
        %v631 = vmul.f32 %v628, %v630
        %v632 = vadd.f32 %v628, %v631
        %vm633 = vweird.f32 %v594
        %vm634 = vweird.f32 %v628
        %vm635 = vmor %vm633, %vm634
        %v636 = vsel %vm635, %v628, %v632
        %v637 = vand.u32 2147483647, %v594
        %vm638 = vcmp.eq.f32.partialorder %v637, 8.507059e+37
        %v639 = vand.u32 %v594, 2147483648
        %v640 = vor.u32 1.1754944e-38, %v639
        %v641 = vsel %vm638, %v640, %v636
        %v642 = vmul.f32 %v576, %v641
        %v643 = vrcp.pop %v597
        %v644 = vmul.f32 %v597, %v643
        %v645 = vsub.f32 1.0, %v644
        %v646 = vmul.f32 %v643, %v645
        %v647 = vadd.f32 %v643, %v646
        %vm648 = vweird.f32 %v597
        %vm649 = vweird.f32 %v643
        %vm650 = vmor %vm648, %vm649
        %v651 = vsel %vm650, %v643, %v647
        %v652 = vand.u32 2147483647, %v597
        %vm653 = vcmp.eq.f32.partialorder %v652, 8.507059e+37
        %v654 = vand.u32 %v597, 2147483648
        %v655 = vor.u32 1.1754944e-38, %v654
        %v656 = vsel %vm653, %v655, %v651
        %v657 = vmul.f32 %v578, %v656
        %v658 = vrcp.pop %v600
        %v659 = vmul.f32 %v600, %v658
        %v660 = vsub.f32 1.0, %v659
        %v661 = vmul.f32 %v658, %v660
        %v662 = vadd.f32 %v658, %v661
        %vm663 = vweird.f32 %v600
        %vm664 = vweird.f32 %v658
        %vm665 = vmor %vm663, %vm664
        %v666 = vsel %vm665, %v658, %v662
        %v667 = vand.u32 2147483647, %v600
        %vm668 = vcmp.eq.f32.partialorder %v667, 8.507059e+37
        %v669 = vand.u32 %v600, 2147483648
        %v670 = vor.u32 1.1754944e-38, %v669
        %v671 = vsel %vm668, %v670, %v666
        %v672 = vmul.f32 %v580, %v671
        %v673 = vrcp.pop %v603
        %v674 = vmul.f32 %v603, %v673
        %v675 = vsub.f32 1.0, %v674
        %v676 = vmul.f32 %v673, %v675
        %v677 = vadd.f32 %v673, %v676
        %vm678 = vweird.f32 %v603
        %vm679 = vweird.f32 %v673
        %vm680 = vmor %vm678, %vm679
        %v681 = vsel %vm680, %v673, %v677
        %v682 = vand.u32 2147483647, %v603
        %vm683 = vcmp.eq.f32.partialorder %v682, 8.507059e+37
        %v684 = vand.u32 %v603, 2147483648
        %v685 = vor.u32 1.1754944e-38, %v684
        %v686 = vsel %vm683, %v685, %v681
        %v687 = vmul.f32 %v582, %v686
        %v688 = vrcp.pop %v606
        %v689 = vmul.f32 %v606, %v688
        %v690 = vsub.f32 1.0, %v689
        %v691 = vmul.f32 %v688, %v690
        %v692 = vadd.f32 %v688, %v691
        %vm693 = vweird.f32 %v606
        %vm694 = vweird.f32 %v688
        %vm695 = vmor %vm693, %vm694
        %v696 = vsel %vm695, %v688, %v692
        %v697 = vand.u32 2147483647, %v606
        %vm698 = vcmp.eq.f32.partialorder %v697, 8.507059e+37
        %v699 = vand.u32 %v606, 2147483648
        %v700 = vor.u32 1.1754944e-38, %v699
        %v701 = vsel %vm698, %v700, %v696
        %v702 = vmul.f32 %v584, %v701
        %v703 = vrcp.pop %v609
        %v704 = vmul.f32 %v609, %v703
        %v705 = vsub.f32 1.0, %v704
        %v706 = vmul.f32 %v703, %v705
        %v707 = vadd.f32 %v703, %v706
        %vm708 = vweird.f32 %v609
        %vm709 = vweird.f32 %v703
        %vm710 = vmor %vm708, %vm709
        %v711 = vsel %vm710, %v703, %v707
        %v712 = vand.u32 2147483647, %v609
        %vm713 = vcmp.eq.f32.partialorder %v712, 8.507059e+37
        %v714 = vand.u32 %v609, 2147483648
        %v715 = vor.u32 1.1754944e-38, %v714
        %v716 = vsel %vm713, %v715, %v711
        %v717 = vmul.f32 %v586, %v716
        %v718 = vrcp.pop %v612
        %v719 = vmul.f32 %v612, %v718
        %v720 = vsub.f32 1.0, %v719
        %v721 = vmul.f32 %v718, %v720
        %v722 = vadd.f32 %v718, %v721
        %vm723 = vweird.f32 %v612
        %vm724 = vweird.f32 %v718
        %vm725 = vmor %vm723, %vm724
        %v726 = vsel %vm725, %v718, %v722
        %v727 = vand.u32 2147483647, %v612
        %vm728 = vcmp.eq.f32.partialorder %v727, 8.507059e+37
        %v729 = vand.u32 %v612, 2147483648
        %v730 = vor.u32 1.1754944e-38, %v729
        %v731 = vsel %vm728, %v730, %v726
        %v732 = vmul.f32 %v588, %v731
        %733 = vrot.lane.b32.xlu0 %v314, 64
        %v734 = vpop.permute.xlu0 %733
        %v737 = vsel %vm540, %v627, 0
        %739 = vmatpush.msra.mxu0 0.0
        %740 = vmatpush.msra.mxu0 0.0
        %741 = vmatpush.msra.mxu0 0.0
        %742 = vmatpush.msra.mxu0 0.0
        %743 = vmatpush.msra.mxu0 0.0
        %744 = vmatpush.msra.mxu0 0.0
        %745 = vmatpush.msra.mxu0 0.0
        %746 = vmatpush.msra.mxu0 0.0
        %747 = vmatpush.msra.mxu0 0.0
        %748 = vmatpush.msra.mxu0 0.0
        %749 = vmatpush.msra.mxu0 0.0
        %750 = vmatpush.msra.mxu0 0.0
        %751 = vmatpush.msra.mxu0 0.0
        %752 = vmatpush.msra.mxu0 0.0
        %753 = vmatpush.msra.mxu0 0.0
        %754 = vmatpush.msra.mxu0 %v734
        %755 = vmatmul.f32.gmra.mxu0 %v737
        %v756 = vpop.f32.mrf.mxu0
        %v757 = vadd.f32 0.0, %v756
        %758 = vdwg.mxu0
        %759 = vrot.lane.b32.xlu0 %v318, 64
        %v760 = vpop.permute.xlu0 %759
        %v763 = vsel %vm540, %v642, 0
        %765 = vmatpush.msra.mxu0 0.0
        %766 = vmatpush.msra.mxu0 0.0
        %767 = vmatpush.msra.mxu0 0.0
        %768 = vmatpush.msra.mxu0 0.0
        %769 = vmatpush.msra.mxu0 0.0
        %770 = vmatpush.msra.mxu0 0.0
        %771 = vmatpush.msra.mxu0 0.0
        %772 = vmatpush.msra.mxu0 0.0
        %773 = vmatpush.msra.mxu0 0.0
        %774 = vmatpush.msra.mxu0 0.0
        %775 = vmatpush.msra.mxu0 0.0
        %776 = vmatpush.msra.mxu0 0.0
        %777 = vmatpush.msra.mxu0 0.0
        %778 = vmatpush.msra.mxu0 0.0
        %779 = vmatpush.msra.mxu0 0.0
        %780 = vmatpush.msra.mxu0 %v760
        %781 = vmatmul.f32.gmra.mxu0 %v763
        %v782 = vpop.f32.mrf.mxu0
        %v783 = vadd.f32 0.0, %v782
        %784 = vdwg.mxu0
        %785 = vrot.lane.b32.xlu0 %v320, 64
        %v786 = vpop.permute.xlu0 %785
        %v789 = vsel %vm540, %v657, 0
        %791 = vmatpush.msra.mxu0 0.0
        %792 = vmatpush.msra.mxu0 0.0
        %793 = vmatpush.msra.mxu0 0.0
        %794 = vmatpush.msra.mxu0 0.0
        %795 = vmatpush.msra.mxu0 0.0
        %796 = vmatpush.msra.mxu0 0.0
        %797 = vmatpush.msra.mxu0 0.0
        %798 = vmatpush.msra.mxu0 0.0
        %799 = vmatpush.msra.mxu0 0.0
        %800 = vmatpush.msra.mxu0 0.0
        %801 = vmatpush.msra.mxu0 0.0
        %802 = vmatpush.msra.mxu0 0.0
        %803 = vmatpush.msra.mxu0 0.0
        %804 = vmatpush.msra.mxu0 0.0
        %805 = vmatpush.msra.mxu0 0.0
        %806 = vmatpush.msra.mxu0 %v786
        %807 = vmatmul.f32.gmra.mxu0 %v789
        %v808 = vpop.f32.mrf.mxu0
        %v809 = vadd.f32 0.0, %v808
        %810 = vdwg.mxu0
        %811 = vrot.lane.b32.xlu0 %v322, 64
        %v812 = vpop.permute.xlu0 %811
        %v815 = vsel %vm540, %v672, 0
        %817 = vmatpush.msra.mxu0 0.0
        %818 = vmatpush.msra.mxu0 0.0
        %819 = vmatpush.msra.mxu0 0.0
        %820 = vmatpush.msra.mxu0 0.0
        %821 = vmatpush.msra.mxu0 0.0
        %822 = vmatpush.msra.mxu0 0.0
        %823 = vmatpush.msra.mxu0 0.0
        %824 = vmatpush.msra.mxu0 0.0
        %825 = vmatpush.msra.mxu0 0.0
        %826 = vmatpush.msra.mxu0 0.0
        %827 = vmatpush.msra.mxu0 0.0
        %828 = vmatpush.msra.mxu0 0.0
        %829 = vmatpush.msra.mxu0 0.0
        %830 = vmatpush.msra.mxu0 0.0
        %831 = vmatpush.msra.mxu0 0.0
        %832 = vmatpush.msra.mxu0 %v812
        %833 = vmatmul.f32.gmra.mxu0 %v815
        %v834 = vpop.f32.mrf.mxu0
        %v835 = vadd.f32 0.0, %v834
        %836 = vdwg.mxu0
        %837 = vrot.lane.b32.xlu0 %v324, 64
        %v838 = vpop.permute.xlu0 %837
        %v841 = vsel %vm540, %v687, 0
        %843 = vmatpush.msra.mxu0 0.0
        %844 = vmatpush.msra.mxu0 0.0
        %845 = vmatpush.msra.mxu0 0.0
        %846 = vmatpush.msra.mxu0 0.0
        %847 = vmatpush.msra.mxu0 0.0
        %848 = vmatpush.msra.mxu0 0.0
        %849 = vmatpush.msra.mxu0 0.0
        %850 = vmatpush.msra.mxu0 0.0
        %851 = vmatpush.msra.mxu0 0.0
        %852 = vmatpush.msra.mxu0 0.0
        %853 = vmatpush.msra.mxu0 0.0
        %854 = vmatpush.msra.mxu0 0.0
        %855 = vmatpush.msra.mxu0 0.0
        %856 = vmatpush.msra.mxu0 0.0
        %857 = vmatpush.msra.mxu0 0.0
        %858 = vmatpush.msra.mxu0 %v838
        %859 = vmatmul.f32.gmra.mxu0 %v841
        %v860 = vpop.f32.mrf.mxu0
        %v861 = vadd.f32 0.0, %v860
        %862 = vdwg.mxu0
        %863 = vrot.lane.b32.xlu0 %v326, 64
        %v864 = vpop.permute.xlu0 %863
        %v867 = vsel %vm540, %v702, 0
        %869 = vmatpush.msra.mxu0 0.0
        %870 = vmatpush.msra.mxu0 0.0
        %871 = vmatpush.msra.mxu0 0.0
        %872 = vmatpush.msra.mxu0 0.0
        %873 = vmatpush.msra.mxu0 0.0
        %874 = vmatpush.msra.mxu0 0.0
        %875 = vmatpush.msra.mxu0 0.0
        %876 = vmatpush.msra.mxu0 0.0
        %877 = vmatpush.msra.mxu0 0.0
        %878 = vmatpush.msra.mxu0 0.0
        %879 = vmatpush.msra.mxu0 0.0
        %880 = vmatpush.msra.mxu0 0.0
        %881 = vmatpush.msra.mxu0 0.0
        %882 = vmatpush.msra.mxu0 0.0
        %883 = vmatpush.msra.mxu0 0.0
        %884 = vmatpush.msra.mxu0 %v864
        %885 = vmatmul.f32.gmra.mxu0 %v867
        %v886 = vpop.f32.mrf.mxu0
        %v887 = vadd.f32 0.0, %v886
        %888 = vdwg.mxu0
        %889 = vrot.lane.b32.xlu0 %v328, 64
        %v890 = vpop.permute.xlu0 %889
        %v893 = vsel %vm540, %v717, 0
        %895 = vmatpush.msra.mxu0 0.0
        %896 = vmatpush.msra.mxu0 0.0
        %897 = vmatpush.msra.mxu0 0.0
        %898 = vmatpush.msra.mxu0 0.0
        %899 = vmatpush.msra.mxu0 0.0
        %900 = vmatpush.msra.mxu0 0.0
        %901 = vmatpush.msra.mxu0 0.0
        %902 = vmatpush.msra.mxu0 0.0
        %903 = vmatpush.msra.mxu0 0.0
        %904 = vmatpush.msra.mxu0 0.0
        %905 = vmatpush.msra.mxu0 0.0
        %906 = vmatpush.msra.mxu0 0.0
        %907 = vmatpush.msra.mxu0 0.0
        %908 = vmatpush.msra.mxu0 0.0
        %909 = vmatpush.msra.mxu0 0.0
        %910 = vmatpush.msra.mxu0 %v890
        %911 = vmatmul.f32.gmra.mxu0 %v893
        %v912 = vpop.f32.mrf.mxu0
        %v913 = vadd.f32 0.0, %v912
        %914 = vdwg.mxu0
        %915 = vrot.lane.b32.xlu0 %v330, 64
        %v916 = vpop.permute.xlu0 %915
        %v919 = vsel %vm540, %v732, 0
        %921 = vmatpush.msra.mxu0 0.0
        %922 = vmatpush.msra.mxu0 0.0
        %923 = vmatpush.msra.mxu0 0.0
        %924 = vmatpush.msra.mxu0 0.0
        %925 = vmatpush.msra.mxu0 0.0
        %926 = vmatpush.msra.mxu0 0.0
        %927 = vmatpush.msra.mxu0 0.0
        %928 = vmatpush.msra.mxu0 0.0
        %929 = vmatpush.msra.mxu0 0.0
        %930 = vmatpush.msra.mxu0 0.0
        %931 = vmatpush.msra.mxu0 0.0
        %932 = vmatpush.msra.mxu0 0.0
        %933 = vmatpush.msra.mxu0 0.0
        %934 = vmatpush.msra.mxu0 0.0
        %935 = vmatpush.msra.mxu0 0.0
        %936 = vmatpush.msra.mxu0 %v916
        %937 = vmatmul.f32.gmra.mxu0 %v919
        %v938 = vpop.f32.mrf.mxu0
        %v939 = vadd.f32 0.0, %v938
        %940 = vdwg.mxu0
        %v941 = vld [vmem:[%s2] sm:$0xf]
        %v942 = vld [vmem:[%s2 + $0x4] sm:$0xf]
        %v943 = vld [vmem:[%s2 + $0x8] sm:$0xf]
        %v944 = vld [vmem:[%s2 + $0xc] sm:$0xf]
        %v945 = vld [vmem:[%s2 + $0x10] sm:$0xf]
        %v946 = vld [vmem:[%s2 + $0x14] sm:$0xf]
        %v947 = vld [vmem:[%s2 + $0x18] sm:$0xf]
        %v948 = vld [vmem:[%s2 + $0x1c] sm:$0xf]
        %v950 = vsel %vm333, %v757, 0
        %vm952 = vcmask 1043456
        %v954 = vsel %vm952, %v941, 0
        %956 = vmatpush.msra.mxu0 0.0
        %957 = vmatpush.msra.mxu0 0.0
        %958 = vmatpush.msra.mxu0 0.0
        %959 = vmatpush.msra.mxu0 0.0
        %960 = vmatpush.msra.mxu0 0.0
        %961 = vmatpush.msra.mxu0 0.0
        %962 = vmatpush.msra.mxu0 0.0
        %963 = vmatpush.msra.mxu0 0.0
        %964 = vmatpush.msra.mxu0 0.0
        %965 = vmatpush.msra.mxu0 0.0
        %966 = vmatpush.msra.mxu0 0.0
        %967 = vmatpush.msra.mxu0 0.0
        %968 = vmatpush.msra.mxu0 0.0
        %969 = vmatpush.msra.mxu0 0.0
        %970 = vmatpush.msra.mxu0 0.0
        %971 = vmatpush.msra.mxu0 %v954
        %972 = vmatmul.f32.gmra.mxu0 %v950
        %v973 = vpop.f32.mrf.mxu0
        %v974 = vadd.f32 0.0, %v973
        %975 = vdwg.mxu0
        %v977 = vsel %vm333, %v783, 0
        %v980 = vsel %vm952, %v942, 0
        %982 = vmatpush.msra.mxu0 0.0
        %983 = vmatpush.msra.mxu0 0.0
        %984 = vmatpush.msra.mxu0 0.0
        %985 = vmatpush.msra.mxu0 0.0
        %986 = vmatpush.msra.mxu0 0.0
        %987 = vmatpush.msra.mxu0 0.0
        %988 = vmatpush.msra.mxu0 0.0
        %989 = vmatpush.msra.mxu0 0.0
        %990 = vmatpush.msra.mxu0 0.0
        %991 = vmatpush.msra.mxu0 0.0
        %992 = vmatpush.msra.mxu0 0.0
        %993 = vmatpush.msra.mxu0 0.0
        %994 = vmatpush.msra.mxu0 0.0
        %995 = vmatpush.msra.mxu0 0.0
        %996 = vmatpush.msra.mxu0 0.0
        %997 = vmatpush.msra.mxu0 %v980
        %998 = vmatmul.f32.gmra.mxu0 %v977
        %v999 = vpop.f32.mrf.mxu0
        %v1000 = vadd.f32 0.0, %v999
        %1001 = vdwg.mxu0
        %v1003 = vsel %vm333, %v809, 0
        %v1006 = vsel %vm952, %v943, 0
        %1008 = vmatpush.msra.mxu0 0.0
        %1009 = vmatpush.msra.mxu0 0.0
        %1010 = vmatpush.msra.mxu0 0.0
        %1011 = vmatpush.msra.mxu0 0.0
        %1012 = vmatpush.msra.mxu0 0.0
        %1013 = vmatpush.msra.mxu0 0.0
        %1014 = vmatpush.msra.mxu0 0.0
        %1015 = vmatpush.msra.mxu0 0.0
        %1016 = vmatpush.msra.mxu0 0.0
        %1017 = vmatpush.msra.mxu0 0.0
        %1018 = vmatpush.msra.mxu0 0.0
        %1019 = vmatpush.msra.mxu0 0.0
        %1020 = vmatpush.msra.mxu0 0.0
        %1021 = vmatpush.msra.mxu0 0.0
        %1022 = vmatpush.msra.mxu0 0.0
        %1023 = vmatpush.msra.mxu0 %v1006
        %1024 = vmatmul.f32.gmra.mxu0 %v1003
        %v1025 = vpop.f32.mrf.mxu0
        %v1026 = vadd.f32 0.0, %v1025
        %1027 = vdwg.mxu0
        %v1029 = vsel %vm333, %v835, 0
        %v1032 = vsel %vm952, %v944, 0
        %1034 = vmatpush.msra.mxu0 0.0
        %1035 = vmatpush.msra.mxu0 0.0
        %1036 = vmatpush.msra.mxu0 0.0
        %1037 = vmatpush.msra.mxu0 0.0
        %1038 = vmatpush.msra.mxu0 0.0
        %1039 = vmatpush.msra.mxu0 0.0
        %1040 = vmatpush.msra.mxu0 0.0
        %1041 = vmatpush.msra.mxu0 0.0
        %1042 = vmatpush.msra.mxu0 0.0
        %1043 = vmatpush.msra.mxu0 0.0
        %1044 = vmatpush.msra.mxu0 0.0
        %1045 = vmatpush.msra.mxu0 0.0
        %1046 = vmatpush.msra.mxu0 0.0
        %1047 = vmatpush.msra.mxu0 0.0
        %1048 = vmatpush.msra.mxu0 0.0
        %1049 = vmatpush.msra.mxu0 %v1032
        %1050 = vmatmul.f32.gmra.mxu0 %v1029
        %v1051 = vpop.f32.mrf.mxu0
        %v1052 = vadd.f32 0.0, %v1051
        %1053 = vdwg.mxu0
        %v1055 = vsel %vm333, %v861, 0
        %v1058 = vsel %vm952, %v945, 0
        %1060 = vmatpush.msra.mxu0 0.0
        %1061 = vmatpush.msra.mxu0 0.0
        %1062 = vmatpush.msra.mxu0 0.0
        %1063 = vmatpush.msra.mxu0 0.0
        %1064 = vmatpush.msra.mxu0 0.0
        %1065 = vmatpush.msra.mxu0 0.0
        %1066 = vmatpush.msra.mxu0 0.0
        %1067 = vmatpush.msra.mxu0 0.0
        %1068 = vmatpush.msra.mxu0 0.0
        %1069 = vmatpush.msra.mxu0 0.0
        %1070 = vmatpush.msra.mxu0 0.0
        %1071 = vmatpush.msra.mxu0 0.0
        %1072 = vmatpush.msra.mxu0 0.0
        %1073 = vmatpush.msra.mxu0 0.0
        %1074 = vmatpush.msra.mxu0 0.0
        %1075 = vmatpush.msra.mxu0 %v1058
        %1076 = vmatmul.f32.gmra.mxu0 %v1055
        %v1077 = vpop.f32.mrf.mxu0
        %v1078 = vadd.f32 0.0, %v1077
        %1079 = vdwg.mxu0
        %v1081 = vsel %vm333, %v887, 0
        %v1084 = vsel %vm952, %v946, 0
        %1086 = vmatpush.msra.mxu0 0.0
        %1087 = vmatpush.msra.mxu0 0.0
        %1088 = vmatpush.msra.mxu0 0.0
        %1089 = vmatpush.msra.mxu0 0.0
        %1090 = vmatpush.msra.mxu0 0.0
        %1091 = vmatpush.msra.mxu0 0.0
        %1092 = vmatpush.msra.mxu0 0.0
        %1093 = vmatpush.msra.mxu0 0.0
        %1094 = vmatpush.msra.mxu0 0.0
        %1095 = vmatpush.msra.mxu0 0.0
        %1096 = vmatpush.msra.mxu0 0.0
        %1097 = vmatpush.msra.mxu0 0.0
        %1098 = vmatpush.msra.mxu0 0.0
        %1099 = vmatpush.msra.mxu0 0.0
        %1100 = vmatpush.msra.mxu0 0.0
        %1101 = vmatpush.msra.mxu0 %v1084
        %1102 = vmatmul.f32.gmra.mxu0 %v1081
        %v1103 = vpop.f32.mrf.mxu0
        %v1104 = vadd.f32 0.0, %v1103
        %1105 = vdwg.mxu0
        %v1107 = vsel %vm333, %v913, 0
        %v1110 = vsel %vm952, %v947, 0
        %1112 = vmatpush.msra.mxu0 0.0
        %1113 = vmatpush.msra.mxu0 0.0
        %1114 = vmatpush.msra.mxu0 0.0
        %1115 = vmatpush.msra.mxu0 0.0
        %1116 = vmatpush.msra.mxu0 0.0
        %1117 = vmatpush.msra.mxu0 0.0
        %1118 = vmatpush.msra.mxu0 0.0
        %1119 = vmatpush.msra.mxu0 0.0
        %1120 = vmatpush.msra.mxu0 0.0
        %1121 = vmatpush.msra.mxu0 0.0
        %1122 = vmatpush.msra.mxu0 0.0
        %1123 = vmatpush.msra.mxu0 0.0
        %1124 = vmatpush.msra.mxu0 0.0
        %1125 = vmatpush.msra.mxu0 0.0
        %1126 = vmatpush.msra.mxu0 0.0
        %1127 = vmatpush.msra.mxu0 %v1110
        %1128 = vmatmul.f32.gmra.mxu0 %v1107
        %v1129 = vpop.f32.mrf.mxu0
        %v1130 = vadd.f32 0.0, %v1129
        %1131 = vdwg.mxu0
        %v1133 = vsel %vm333, %v939, 0
        %v1136 = vsel %vm952, %v948, 0
        %1138 = vmatpush.msra.mxu0 0.0
        %1139 = vmatpush.msra.mxu0 0.0
        %1140 = vmatpush.msra.mxu0 0.0
        %1141 = vmatpush.msra.mxu0 0.0
        %1142 = vmatpush.msra.mxu0 0.0
        %1143 = vmatpush.msra.mxu0 0.0
        %1144 = vmatpush.msra.mxu0 0.0
        %1145 = vmatpush.msra.mxu0 0.0
        %1146 = vmatpush.msra.mxu0 0.0
        %1147 = vmatpush.msra.mxu0 0.0
        %1148 = vmatpush.msra.mxu0 0.0
        %1149 = vmatpush.msra.mxu0 0.0
        %1150 = vmatpush.msra.mxu0 0.0
        %1151 = vmatpush.msra.mxu0 0.0
        %1152 = vmatpush.msra.mxu0 0.0
        %1153 = vmatpush.msra.mxu0 %v1136
        %1154 = vmatmul.f32.gmra.mxu0 %v1133
        %v1155 = vpop.f32.mrf.mxu0
        %v1156 = vadd.f32 0.0, %v1155
        %1157 = vdwg.mxu0
        %v1158 = vsel %vm292, %v974, 0.0
        %v1159 = vsel %vm292, %v1000, 0.0
        %v1160 = vadd.f32 %v1158, %v1159
        %v1161 = vsel %vm292, %v1026, 0.0
        %v1162 = vadd.f32 %v1160, %v1161
        %v1163 = vsel %vm292, %v1052, 0.0
        %v1164 = vadd.f32 %v1162, %v1163
        %v1165 = vsel %vm292, %v1078, 0.0
        %v1166 = vadd.f32 %v1164, %v1165
        %v1167 = vsel %vm292, %v1104, 0.0
        %v1168 = vadd.f32 %v1166, %v1167
        %v1169 = vsel %vm292, %v1130, 0.0
        %v1170 = vadd.f32 %v1168, %v1169
        %v1171 = vsel %vm292, %v1156, 0.0
        %v1172 = vadd.f32 %v1170, %v1171
        %v1173 = vperm.slane %v287, 0
        %v1174 = vadd.f32 %v1172, %v1173
        %v1175 = vmul.f32 %v286, 1.4142135
        %v1176 = vadd.f32 %v1174, %v1175
        %v1177 = vsel %vm292, %v1176, 0.0
        %1178 = vadd.xlane.f32.xlu0 %v1177
        %v1179 = vpop.xlane.xlu0 %1178
        %v1180 = vrcp.pop 32.0
        %v1181 = vmul.f32 32.0, %v1180
        %v1182 = vsub.f32 1.0, %v1181
        %v1183 = vmul.f32 %v1180, %v1182
        %v1184 = vadd.f32 %v1180, %v1183
        %vm1185 = vweird.f32 %v1180
        %v1186 = vsel %vm1185, %v1180, %v1184
        %v1187 = vmul.f32 %v1179, %v1186
        %v1188 = vsub.f32 %v1176, %v1187
        %v1189 = vmul.f32 %v1188, %v1188
        %v1190 = vsel %vm292, %v1189, 0.0
        %1191 = vadd.xlane.f32.xlu0 %v1190
        %v1192 = vpop.xlane.xlu0 %1191
        %v1193 = vmul.f32 %v1192, %v1186
        %v1194 = vadd.f32 %v1193, 1e-05
        %v1195 = vrsqrt.pop %v1194
        %v1196 = vmul.f32 %v1195, %v1194
        %v1197 = vmul.f32 %v1196, %v1195
        %v1198 = vmul.f32 0.5, %v1197
        %v1199 = vsub.f32 1.5, %v1198
        %v1200 = vmul.f32 %v1195, %v1199
        %vm1201 = vweird.f32 %v1194
        %vm1202 = vweird.f32 %v1195
        %vm1203 = vmor %vm1201, %vm1202
        %v1204 = vsel %vm1203, %v1195, %v1200
        %v1205 = vmul.f32 %v1188, %v1204
        %v1206 = vperm.slane %v287, 1
        %v1207 = vmul.f32 %v1205, %v1206
        %v1208 = vperm.slane %v287, 2
        %v1209 = vadd.f32 %v1207, %v1208
        %v1210 = vld [vmem:[%s3] sm:$0xff]
        %v1211 = vld [vmem:[%s3 + $0x8] sm:$0xff]
        %v1212 = vld [vmem:[%s3 + $0x10] sm:$0xff]
        %v1213 = vld [vmem:[%s3 + $0x18] sm:$0xff]
        %v1214 = vperm.slane %v287, 3
        %v1216 = vsel %vm292, %v1209, 0
        %1218 = vmatpush.msra.mxu0 0.0
        %1219 = vmatpush.msra.mxu0 0.0
        %1220 = vmatpush.msra.mxu0 0.0
        %1221 = vmatpush.msra.mxu0 0.0
        %1222 = vmatpush.msra.mxu0 0.0
        %1223 = vmatpush.msra.mxu0 0.0
        %1224 = vmatpush.msra.mxu0 0.0
        %1225 = vmatpush.msra.mxu0 0.0
        %1226 = vmatpush.msra.mxu0 0.0
        %1227 = vmatpush.msra.mxu0 0.0
        %1228 = vmatpush.msra.mxu0 0.0
        %1229 = vmatpush.msra.mxu0 0.0
        %1230 = vmatpush.msra.mxu0 %v1213
        %1231 = vmatpush.msra.mxu0 %v1212
        %1232 = vmatpush.msra.mxu0 %v1211
        %1233 = vmatpush.msra.mxu0 %v1210
        %1234 = vmatmul.f32.gmra.mxu0 %v1216
        %v1235 = vpop.f32.mrf.mxu0
        %v1236 = vadd.f32 %v1214, %v1235
        %1237 = vdwg.mxu0
        %v1238 = vmax.f32 %v1236, 0.0
        %v1239 = vld [vmem:[%s4] sm:$0xff]
        %v1240 = vld [vmem:[%s4 + $0x8] sm:$0xff]
        %v1241 = vld [vmem:[%s4 + $0x10] sm:$0xff]
        %v1242 = vld [vmem:[%s4 + $0x18] sm:$0xff]
        %v1243 = vld [vmem:[%s4 + $0x20] sm:$0xff]
        %v1244 = vld [vmem:[%s4 + $0x28] sm:$0xff]
        %v1245 = vld [vmem:[%s4 + $0x30] sm:$0xff]
        %v1246 = vld [vmem:[%s4 + $0x38] sm:$0xff]
        %v1247 = vperm.slane %v287, 4
        %vm1248 = vcmask 523264
        %v1250 = vsel %vm1248, %v1238, 0
        %1252 = vmatpush.msra.mxu0 0.0
        %1253 = vmatpush.msra.mxu0 0.0
        %1254 = vmatpush.msra.mxu0 0.0
        %1255 = vmatpush.msra.mxu0 0.0
        %1256 = vmatpush.msra.mxu0 0.0
        %1257 = vmatpush.msra.mxu0 0.0
        %1258 = vmatpush.msra.mxu0 0.0
        %1259 = vmatpush.msra.mxu0 0.0
        %1260 = vmatpush.msra.mxu0 %v1246
        %1261 = vmatpush.msra.mxu0 %v1245
        %1262 = vmatpush.msra.mxu0 %v1244
        %1263 = vmatpush.msra.mxu0 %v1243
        %1264 = vmatpush.msra.mxu0 %v1242
        %1265 = vmatpush.msra.mxu0 %v1241
        %1266 = vmatpush.msra.mxu0 %v1240
        %1267 = vmatpush.msra.mxu0 %v1239
        %1268 = vmatmul.f32.gmra.mxu0 %v1250
        %v1269 = vpop.f32.mrf.mxu0
        %v1270 = vadd.f32 %v1247, %v1269
        %1271 = vdwg.mxu0
        %v1272 = vmul.f32 %v1209, 1.4142135
        %v1273 = vadd.f32 %v1270, %v1272
        %v1274 = vsel %vm292, %v1273, 0.0
        %1275 = vadd.xlane.f32.xlu0 %v1274
        %v1276 = vpop.xlane.xlu0 %1275
        %v1277 = vmul.f32 %v1276, %v1186
        %v1278 = vsub.f32 %v1273, %v1277
        %v1279 = vmul.f32 %v1278, %v1278
        %v1280 = vsel %vm292, %v1279, 0.0
        %1281 = vadd.xlane.f32.xlu0 %v1280
        %v1282 = vpop.xlane.xlu0 %1281
        %v1283 = vmul.f32 %v1282, %v1186
        %v1284 = vadd.f32 %v1283, 1e-05
        %v1285 = vrsqrt.pop %v1284
        %v1286 = vmul.f32 %v1285, %v1284
        %v1287 = vmul.f32 %v1286, %v1285
        %v1288 = vmul.f32 0.5, %v1287
        %v1289 = vsub.f32 1.5, %v1288
        %v1290 = vmul.f32 %v1285, %v1289
        %vm1291 = vweird.f32 %v1284
        %vm1292 = vweird.f32 %v1285
        %vm1293 = vmor %vm1291, %vm1292
        %v1294 = vsel %vm1293, %v1285, %v1290
        %v1295 = vmul.f32 %v1278, %v1294
        %v1296 = vperm.slane %v287, 5
        %v1297 = vmul.f32 %v1295, %v1296
        %v1298 = vperm.slane %v287, 6
        %v1299 = vadd.f32 %v1297, %v1298
        %s1300 = scalar_lea.vmem [#allocation5], 8
        %v1301 = vld [vmem:[%s1300] sm:$0xff]
        %s1302 = scalar_lea.vmem %s1, 32
        %v1303 = vld [vmem:[%s1302] sm:$0xff]
        %v1304 = vld [vmem:[%s1302 + $0x8] sm:$0xff]
        %v1305 = vld [vmem:[%s1302 + $0x10] sm:$0xff]
        %v1306 = vld [vmem:[%s1302 + $0x18] sm:$0xff]
        %v1308 = vsel %vm292, %v1299, 0
        %1310 = vmatpush.msra.mxu0 0.0
        %1311 = vmatpush.msra.mxu0 0.0
        %1312 = vmatpush.msra.mxu0 0.0
        %1313 = vmatpush.msra.mxu0 0.0
        %1314 = vmatpush.msra.mxu0 0.0
        %1315 = vmatpush.msra.mxu0 0.0
        %1316 = vmatpush.msra.mxu0 0.0
        %1317 = vmatpush.msra.mxu0 0.0
        %1318 = vmatpush.msra.mxu0 0.0
        %1319 = vmatpush.msra.mxu0 0.0
        %1320 = vmatpush.msra.mxu0 0.0
        %1321 = vmatpush.msra.mxu0 0.0
        %1322 = vmatpush.msra.mxu0 %v1306
        %1323 = vmatpush.msra.mxu0 %v1305
        %1324 = vmatpush.msra.mxu0 %v1304
        %1325 = vmatpush.msra.mxu0 %v1303
        %1326 = vmatmul.f32.gmra.mxu0 %v1308
        %v1327 = vpop.f32.mrf.mxu0
        %v1328 = vadd.f32 0.0, %v1327
        %1329 = vdwg.mxu0
        %1331 = vrot.lane.b32.xlu0 %v1328, 124
        %v1332 = vpop.permute.xlu0 %1331
        %1333 = vrot.lane.b32.xlu0 %v1328, 120
        %v1334 = vpop.permute.xlu0 %1333
        %1335 = vrot.lane.b32.xlu0 %v1328, 116
        %v1336 = vpop.permute.xlu0 %1335
        %1337 = vrot.lane.b32.xlu0 %v1328, 112
        %v1338 = vpop.permute.xlu0 %1337
        %1339 = vrot.lane.b32.xlu0 %v1328, 108
        %v1340 = vpop.permute.xlu0 %1339
        %1341 = vrot.lane.b32.xlu0 %v1328, 104
        %v1342 = vpop.permute.xlu0 %1341
        %1343 = vrot.lane.b32.xlu0 %v1328, 100
        %v1344 = vpop.permute.xlu0 %1343
        %1345 = vrot.lane.b32.xlu0 %v1328, 96
        %v1346 = vpop.permute.xlu0 %1345
        %v1347 = vsel %vm333, %v1328, 0
        %v1349 = vsel %vm333, %v1346, 0
        %1351 = vmatpush.xpose.msra.mxu0 0.0
        %1352 = vmatpush.xpose.msra.mxu0 0.0
        %1353 = vmatpush.xpose.msra.mxu0 0.0
        %1354 = vmatpush.xpose.msra.mxu0 0.0
        %1355 = vmatpush.xpose.msra.mxu0 0.0
        %1356 = vmatpush.xpose.msra.mxu0 0.0
        %1357 = vmatpush.xpose.msra.mxu0 0.0
        %1358 = vmatpush.xpose.msra.mxu0 0.0
        %1359 = vmatpush.xpose.msra.mxu0 0.0
        %1360 = vmatpush.xpose.msra.mxu0 0.0
        %1361 = vmatpush.xpose.msra.mxu0 0.0
        %1362 = vmatpush.xpose.msra.mxu0 0.0
        %1363 = vmatpush.xpose.msra.mxu0 0.0
        %1364 = vmatpush.xpose.msra.mxu0 0.0
        %1365 = vmatpush.xpose.msra.mxu0 0.0
        %1366 = vmatpush.xpose.msra.mxu0 %v1349
        %1367 = vmatmul.f32.gmra.mxu0 %v1347
        %v1368 = vpop.f32.mrf.mxu0
        %v1369 = vadd.f32 0.0, %v1368
        %1370 = vdwg.mxu0
        %1371 = vrot.lane.b32.xlu0 %v1332, 96
        %v1372 = vpop.permute.xlu0 %1371
        %v1373 = vsel %vm333, %v1332, 0
        %v1375 = vsel %vm333, %v1372, 0
        %1377 = vmatpush.xpose.msra.mxu0 0.0
        %1378 = vmatpush.xpose.msra.mxu0 0.0
        %1379 = vmatpush.xpose.msra.mxu0 0.0
        %1380 = vmatpush.xpose.msra.mxu0 0.0
        %1381 = vmatpush.xpose.msra.mxu0 0.0
        %1382 = vmatpush.xpose.msra.mxu0 0.0
        %1383 = vmatpush.xpose.msra.mxu0 0.0
        %1384 = vmatpush.xpose.msra.mxu0 0.0
        %1385 = vmatpush.xpose.msra.mxu0 0.0
        %1386 = vmatpush.xpose.msra.mxu0 0.0
        %1387 = vmatpush.xpose.msra.mxu0 0.0
        %1388 = vmatpush.xpose.msra.mxu0 0.0
        %1389 = vmatpush.xpose.msra.mxu0 0.0
        %1390 = vmatpush.xpose.msra.mxu0 0.0
        %1391 = vmatpush.xpose.msra.mxu0 0.0
        %1392 = vmatpush.xpose.msra.mxu0 %v1375
        %1393 = vmatmul.f32.gmra.mxu0 %v1373
        %v1394 = vpop.f32.mrf.mxu0
        %v1395 = vadd.f32 0.0, %v1394
        %1396 = vdwg.mxu0
        %1397 = vrot.lane.b32.xlu0 %v1334, 96
        %v1398 = vpop.permute.xlu0 %1397
        %v1399 = vsel %vm333, %v1334, 0
        %v1401 = vsel %vm333, %v1398, 0
        %1403 = vmatpush.xpose.msra.mxu0 0.0
        %1404 = vmatpush.xpose.msra.mxu0 0.0
        %1405 = vmatpush.xpose.msra.mxu0 0.0
        %1406 = vmatpush.xpose.msra.mxu0 0.0
        %1407 = vmatpush.xpose.msra.mxu0 0.0
        %1408 = vmatpush.xpose.msra.mxu0 0.0
        %1409 = vmatpush.xpose.msra.mxu0 0.0
        %1410 = vmatpush.xpose.msra.mxu0 0.0
        %1411 = vmatpush.xpose.msra.mxu0 0.0
        %1412 = vmatpush.xpose.msra.mxu0 0.0
        %1413 = vmatpush.xpose.msra.mxu0 0.0
        %1414 = vmatpush.xpose.msra.mxu0 0.0
        %1415 = vmatpush.xpose.msra.mxu0 0.0
        %1416 = vmatpush.xpose.msra.mxu0 0.0
        %1417 = vmatpush.xpose.msra.mxu0 0.0
        %1418 = vmatpush.xpose.msra.mxu0 %v1401
        %1419 = vmatmul.f32.gmra.mxu0 %v1399
        %v1420 = vpop.f32.mrf.mxu0
        %v1421 = vadd.f32 0.0, %v1420
        %1422 = vdwg.mxu0
        %1423 = vrot.lane.b32.xlu0 %v1336, 96
        %v1424 = vpop.permute.xlu0 %1423
        %v1425 = vsel %vm333, %v1336, 0
        %v1427 = vsel %vm333, %v1424, 0
        %1429 = vmatpush.xpose.msra.mxu0 0.0
        %1430 = vmatpush.xpose.msra.mxu0 0.0
        %1431 = vmatpush.xpose.msra.mxu0 0.0
        %1432 = vmatpush.xpose.msra.mxu0 0.0
        %1433 = vmatpush.xpose.msra.mxu0 0.0
        %1434 = vmatpush.xpose.msra.mxu0 0.0
        %1435 = vmatpush.xpose.msra.mxu0 0.0
        %1436 = vmatpush.xpose.msra.mxu0 0.0
        %1437 = vmatpush.xpose.msra.mxu0 0.0
        %1438 = vmatpush.xpose.msra.mxu0 0.0
        %1439 = vmatpush.xpose.msra.mxu0 0.0
        %1440 = vmatpush.xpose.msra.mxu0 0.0
        %1441 = vmatpush.xpose.msra.mxu0 0.0
        %1442 = vmatpush.xpose.msra.mxu0 0.0
        %1443 = vmatpush.xpose.msra.mxu0 0.0
        %1444 = vmatpush.xpose.msra.mxu0 %v1427
        %1445 = vmatmul.f32.gmra.mxu0 %v1425
        %v1446 = vpop.f32.mrf.mxu0
        %v1447 = vadd.f32 0.0, %v1446
        %1448 = vdwg.mxu0
        %1449 = vrot.lane.b32.xlu0 %v1338, 96
        %v1450 = vpop.permute.xlu0 %1449
        %v1451 = vsel %vm333, %v1338, 0
        %v1453 = vsel %vm333, %v1450, 0
        %1455 = vmatpush.xpose.msra.mxu0 0.0
        %1456 = vmatpush.xpose.msra.mxu0 0.0
        %1457 = vmatpush.xpose.msra.mxu0 0.0
        %1458 = vmatpush.xpose.msra.mxu0 0.0
        %1459 = vmatpush.xpose.msra.mxu0 0.0
        %1460 = vmatpush.xpose.msra.mxu0 0.0
        %1461 = vmatpush.xpose.msra.mxu0 0.0
        %1462 = vmatpush.xpose.msra.mxu0 0.0
        %1463 = vmatpush.xpose.msra.mxu0 0.0
        %1464 = vmatpush.xpose.msra.mxu0 0.0
        %1465 = vmatpush.xpose.msra.mxu0 0.0
        %1466 = vmatpush.xpose.msra.mxu0 0.0
        %1467 = vmatpush.xpose.msra.mxu0 0.0
        %1468 = vmatpush.xpose.msra.mxu0 0.0
        %1469 = vmatpush.xpose.msra.mxu0 0.0
        %1470 = vmatpush.xpose.msra.mxu0 %v1453
        %1471 = vmatmul.f32.gmra.mxu0 %v1451
        %v1472 = vpop.f32.mrf.mxu0
        %v1473 = vadd.f32 0.0, %v1472
        %1474 = vdwg.mxu0
        %1475 = vrot.lane.b32.xlu0 %v1340, 96
        %v1476 = vpop.permute.xlu0 %1475
        %v1477 = vsel %vm333, %v1340, 0
        %v1479 = vsel %vm333, %v1476, 0
        %1481 = vmatpush.xpose.msra.mxu0 0.0
        %1482 = vmatpush.xpose.msra.mxu0 0.0
        %1483 = vmatpush.xpose.msra.mxu0 0.0
        %1484 = vmatpush.xpose.msra.mxu0 0.0
        %1485 = vmatpush.xpose.msra.mxu0 0.0
        %1486 = vmatpush.xpose.msra.mxu0 0.0
        %1487 = vmatpush.xpose.msra.mxu0 0.0
        %1488 = vmatpush.xpose.msra.mxu0 0.0
        %1489 = vmatpush.xpose.msra.mxu0 0.0
        %1490 = vmatpush.xpose.msra.mxu0 0.0
        %1491 = vmatpush.xpose.msra.mxu0 0.0
        %1492 = vmatpush.xpose.msra.mxu0 0.0
        %1493 = vmatpush.xpose.msra.mxu0 0.0
        %1494 = vmatpush.xpose.msra.mxu0 0.0
        %1495 = vmatpush.xpose.msra.mxu0 0.0
        %1496 = vmatpush.xpose.msra.mxu0 %v1479
        %1497 = vmatmul.f32.gmra.mxu0 %v1477
        %v1498 = vpop.f32.mrf.mxu0
        %v1499 = vadd.f32 0.0, %v1498
        %1500 = vdwg.mxu0
        %1501 = vrot.lane.b32.xlu0 %v1342, 96
        %v1502 = vpop.permute.xlu0 %1501
        %v1503 = vsel %vm333, %v1342, 0
        %v1505 = vsel %vm333, %v1502, 0
        %1507 = vmatpush.xpose.msra.mxu0 0.0
        %1508 = vmatpush.xpose.msra.mxu0 0.0
        %1509 = vmatpush.xpose.msra.mxu0 0.0
        %1510 = vmatpush.xpose.msra.mxu0 0.0
        %1511 = vmatpush.xpose.msra.mxu0 0.0
        %1512 = vmatpush.xpose.msra.mxu0 0.0
        %1513 = vmatpush.xpose.msra.mxu0 0.0
        %1514 = vmatpush.xpose.msra.mxu0 0.0
        %1515 = vmatpush.xpose.msra.mxu0 0.0
        %1516 = vmatpush.xpose.msra.mxu0 0.0
        %1517 = vmatpush.xpose.msra.mxu0 0.0
        %1518 = vmatpush.xpose.msra.mxu0 0.0
        %1519 = vmatpush.xpose.msra.mxu0 0.0
        %1520 = vmatpush.xpose.msra.mxu0 0.0
        %1521 = vmatpush.xpose.msra.mxu0 0.0
        %1522 = vmatpush.xpose.msra.mxu0 %v1505
        %1523 = vmatmul.f32.gmra.mxu0 %v1503
        %v1524 = vpop.f32.mrf.mxu0
        %v1525 = vadd.f32 0.0, %v1524
        %1526 = vdwg.mxu0
        %1527 = vrot.lane.b32.xlu0 %v1344, 96
        %v1528 = vpop.permute.xlu0 %1527
        %v1529 = vsel %vm333, %v1344, 0
        %v1531 = vsel %vm333, %v1528, 0
        %1533 = vmatpush.xpose.msra.mxu0 0.0
        %1534 = vmatpush.xpose.msra.mxu0 0.0
        %1535 = vmatpush.xpose.msra.mxu0 0.0
        %1536 = vmatpush.xpose.msra.mxu0 0.0
        %1537 = vmatpush.xpose.msra.mxu0 0.0
        %1538 = vmatpush.xpose.msra.mxu0 0.0
        %1539 = vmatpush.xpose.msra.mxu0 0.0
        %1540 = vmatpush.xpose.msra.mxu0 0.0
        %1541 = vmatpush.xpose.msra.mxu0 0.0
        %1542 = vmatpush.xpose.msra.mxu0 0.0
        %1543 = vmatpush.xpose.msra.mxu0 0.0
        %1544 = vmatpush.xpose.msra.mxu0 0.0
        %1545 = vmatpush.xpose.msra.mxu0 0.0
        %1546 = vmatpush.xpose.msra.mxu0 0.0
        %1547 = vmatpush.xpose.msra.mxu0 0.0
        %1548 = vmatpush.xpose.msra.mxu0 %v1531
        %1549 = vmatmul.f32.gmra.mxu0 %v1529
        %v1550 = vpop.f32.mrf.mxu0
        %v1551 = vadd.f32 0.0, %v1550
        %1552 = vdwg.mxu0
        %v1553 = vsel %vm540, %v1369, -inf
        %1554 = vmax.xlane.f32.xlu0 %v1553
        %v1555 = vpop.xlane.xlu0 %1554
        %v1556 = vsel %vm540, %v1395, -inf
        %1557 = vmax.xlane.f32.xlu0 %v1556
        %v1558 = vpop.xlane.xlu0 %1557
        %v1559 = vsel %vm540, %v1421, -inf
        %1560 = vmax.xlane.f32.xlu0 %v1559
        %v1561 = vpop.xlane.xlu0 %1560
        %v1562 = vsel %vm540, %v1447, -inf
        %1563 = vmax.xlane.f32.xlu0 %v1562
        %v1564 = vpop.xlane.xlu0 %1563
        %v1565 = vsel %vm540, %v1473, -inf
        %1566 = vmax.xlane.f32.xlu0 %v1565
        %v1567 = vpop.xlane.xlu0 %1566
        %v1568 = vsel %vm540, %v1499, -inf
        %1569 = vmax.xlane.f32.xlu0 %v1568
        %v1570 = vpop.xlane.xlu0 %1569
        %v1571 = vsel %vm540, %v1525, -inf
        %1572 = vmax.xlane.f32.xlu0 %v1571
        %v1573 = vpop.xlane.xlu0 %1572
        %v1574 = vsel %vm540, %v1551, -inf
        %1575 = vmax.xlane.f32.xlu0 %v1574
        %v1576 = vpop.xlane.xlu0 %1575
        %v1577 = vsub.f32 %v1369, %v1555
        %v1578 = vsub.f32 %v1395, %v1558
        %v1579 = vsub.f32 %v1421, %v1561
        %v1580 = vsub.f32 %v1447, %v1564
        %v1581 = vsub.f32 %v1473, %v1567
        %v1582 = vsub.f32 %v1499, %v1570
        %v1583 = vsub.f32 %v1525, %v1573
        %v1584 = vsub.f32 %v1551, %v1576
        %v1585 = vmul.f32 %v1577, 1.442695
        %v1586 = vpow.pop %v1585
        %v1587 = vmul.f32 %v1578, 1.442695
        %v1588 = vpow.pop %v1587
        %v1589 = vmul.f32 %v1579, 1.442695
        %v1590 = vpow.pop %v1589
        %v1591 = vmul.f32 %v1580, 1.442695
        %v1592 = vpow.pop %v1591
        %v1593 = vmul.f32 %v1581, 1.442695
        %v1594 = vpow.pop %v1593
        %v1595 = vmul.f32 %v1582, 1.442695
        %v1596 = vpow.pop %v1595
        %v1597 = vmul.f32 %v1583, 1.442695
        %v1598 = vpow.pop %v1597
        %v1599 = vmul.f32 %v1584, 1.442695
        %v1600 = vpow.pop %v1599
        %v1601 = vsel %vm540, %v1586, 0.0
        %1602 = vadd.xlane.f32.xlu0 %v1601
        %v1603 = vpop.xlane.xlu0 %1602
        %v1604 = vsel %vm540, %v1588, 0.0
        %1605 = vadd.xlane.f32.xlu0 %v1604
        %v1606 = vpop.xlane.xlu0 %1605
        %v1607 = vsel %vm540, %v1590, 0.0
        %1608 = vadd.xlane.f32.xlu0 %v1607
        %v1609 = vpop.xlane.xlu0 %1608
        %v1610 = vsel %vm540, %v1592, 0.0
        %1611 = vadd.xlane.f32.xlu0 %v1610
        %v1612 = vpop.xlane.xlu0 %1611
        %v1613 = vsel %vm540, %v1594, 0.0
        %1614 = vadd.xlane.f32.xlu0 %v1613
        %v1615 = vpop.xlane.xlu0 %1614
        %v1616 = vsel %vm540, %v1596, 0.0
        %1617 = vadd.xlane.f32.xlu0 %v1616
        %v1618 = vpop.xlane.xlu0 %1617
        %v1619 = vsel %vm540, %v1598, 0.0
        %1620 = vadd.xlane.f32.xlu0 %v1619
        %v1621 = vpop.xlane.xlu0 %1620
        %v1622 = vsel %vm540, %v1600, 0.0
        %1623 = vadd.xlane.f32.xlu0 %v1622
        %v1624 = vpop.xlane.xlu0 %1623
        %v1625 = vrcp.pop %v1603
        %v1626 = vmul.f32 %v1603, %v1625
        %v1627 = vsub.f32 1.0, %v1626
        %v1628 = vmul.f32 %v1625, %v1627
        %v1629 = vadd.f32 %v1625, %v1628
        %vm1630 = vweird.f32 %v1603
        %vm1631 = vweird.f32 %v1625
        %vm1632 = vmor %vm1630, %vm1631
        %v1633 = vsel %vm1632, %v1625, %v1629
        %v1634 = vand.u32 2147483647, %v1603
        %vm1635 = vcmp.eq.f32.partialorder %v1634, 8.507059e+37
        %v1636 = vand.u32 %v1603, 2147483648
        %v1637 = vor.u32 1.1754944e-38, %v1636
        %v1638 = vsel %vm1635, %v1637, %v1633
        %v1639 = vmul.f32 %v1586, %v1638
        %v1640 = vrcp.pop %v1606
        %v1641 = vmul.f32 %v1606, %v1640
        %v1642 = vsub.f32 1.0, %v1641
        %v1643 = vmul.f32 %v1640, %v1642
        %v1644 = vadd.f32 %v1640, %v1643
        %vm1645 = vweird.f32 %v1606
        %vm1646 = vweird.f32 %v1640
        %vm1647 = vmor %vm1645, %vm1646
        %v1648 = vsel %vm1647, %v1640, %v1644
        %v1649 = vand.u32 2147483647, %v1606
        %vm1650 = vcmp.eq.f32.partialorder %v1649, 8.507059e+37
        %v1651 = vand.u32 %v1606, 2147483648
        %v1652 = vor.u32 1.1754944e-38, %v1651
        %v1653 = vsel %vm1650, %v1652, %v1648
        %v1654 = vmul.f32 %v1588, %v1653
        %v1655 = vrcp.pop %v1609
        %v1656 = vmul.f32 %v1609, %v1655
        %v1657 = vsub.f32 1.0, %v1656
        %v1658 = vmul.f32 %v1655, %v1657
        %v1659 = vadd.f32 %v1655, %v1658
        %vm1660 = vweird.f32 %v1609
        %vm1661 = vweird.f32 %v1655
        %vm1662 = vmor %vm1660, %vm1661
        %v1663 = vsel %vm1662, %v1655, %v1659
        %v1664 = vand.u32 2147483647, %v1609
        %vm1665 = vcmp.eq.f32.partialorder %v1664, 8.507059e+37
        %v1666 = vand.u32 %v1609, 2147483648
        %v1667 = vor.u32 1.1754944e-38, %v1666
        %v1668 = vsel %vm1665, %v1667, %v1663
        %v1669 = vmul.f32 %v1590, %v1668
        %v1670 = vrcp.pop %v1612
        %v1671 = vmul.f32 %v1612, %v1670
        %v1672 = vsub.f32 1.0, %v1671
        %v1673 = vmul.f32 %v1670, %v1672
        %v1674 = vadd.f32 %v1670, %v1673
        %vm1675 = vweird.f32 %v1612
        %vm1676 = vweird.f32 %v1670
        %vm1677 = vmor %vm1675, %vm1676
        %v1678 = vsel %vm1677, %v1670, %v1674
        %v1679 = vand.u32 2147483647, %v1612
        %vm1680 = vcmp.eq.f32.partialorder %v1679, 8.507059e+37
        %v1681 = vand.u32 %v1612, 2147483648
        %v1682 = vor.u32 1.1754944e-38, %v1681
        %v1683 = vsel %vm1680, %v1682, %v1678
        %v1684 = vmul.f32 %v1592, %v1683
        %v1685 = vrcp.pop %v1615
        %v1686 = vmul.f32 %v1615, %v1685
        %v1687 = vsub.f32 1.0, %v1686
        %v1688 = vmul.f32 %v1685, %v1687
        %v1689 = vadd.f32 %v1685, %v1688
        %vm1690 = vweird.f32 %v1615
        %vm1691 = vweird.f32 %v1685
        %vm1692 = vmor %vm1690, %vm1691
        %v1693 = vsel %vm1692, %v1685, %v1689
        %v1694 = vand.u32 2147483647, %v1615
        %vm1695 = vcmp.eq.f32.partialorder %v1694, 8.507059e+37
        %v1696 = vand.u32 %v1615, 2147483648
        %v1697 = vor.u32 1.1754944e-38, %v1696
        %v1698 = vsel %vm1695, %v1697, %v1693
        %v1699 = vmul.f32 %v1594, %v1698
        %v1700 = vrcp.pop %v1618
        %v1701 = vmul.f32 %v1618, %v1700
        %v1702 = vsub.f32 1.0, %v1701
        %v1703 = vmul.f32 %v1700, %v1702
        %v1704 = vadd.f32 %v1700, %v1703
        %vm1705 = vweird.f32 %v1618
        %vm1706 = vweird.f32 %v1700
        %vm1707 = vmor %vm1705, %vm1706
        %v1708 = vsel %vm1707, %v1700, %v1704
        %v1709 = vand.u32 2147483647, %v1618
        %vm1710 = vcmp.eq.f32.partialorder %v1709, 8.507059e+37
        %v1711 = vand.u32 %v1618, 2147483648
        %v1712 = vor.u32 1.1754944e-38, %v1711
        %v1713 = vsel %vm1710, %v1712, %v1708
        %v1714 = vmul.f32 %v1596, %v1713
        %v1715 = vrcp.pop %v1621
        %v1716 = vmul.f32 %v1621, %v1715
        %v1717 = vsub.f32 1.0, %v1716
        %v1718 = vmul.f32 %v1715, %v1717
        %v1719 = vadd.f32 %v1715, %v1718
        %vm1720 = vweird.f32 %v1621
        %vm1721 = vweird.f32 %v1715
        %vm1722 = vmor %vm1720, %vm1721
        %v1723 = vsel %vm1722, %v1715, %v1719
        %v1724 = vand.u32 2147483647, %v1621
        %vm1725 = vcmp.eq.f32.partialorder %v1724, 8.507059e+37
        %v1726 = vand.u32 %v1621, 2147483648
        %v1727 = vor.u32 1.1754944e-38, %v1726
        %v1728 = vsel %vm1725, %v1727, %v1723
        %v1729 = vmul.f32 %v1598, %v1728
        %v1730 = vrcp.pop %v1624
        %v1731 = vmul.f32 %v1624, %v1730
        %v1732 = vsub.f32 1.0, %v1731
        %v1733 = vmul.f32 %v1730, %v1732
        %v1734 = vadd.f32 %v1730, %v1733
        %vm1735 = vweird.f32 %v1624
        %vm1736 = vweird.f32 %v1730
        %vm1737 = vmor %vm1735, %vm1736
        %v1738 = vsel %vm1737, %v1730, %v1734
        %v1739 = vand.u32 2147483647, %v1624
        %vm1740 = vcmp.eq.f32.partialorder %v1739, 8.507059e+37
        %v1741 = vand.u32 %v1624, 2147483648
        %v1742 = vor.u32 1.1754944e-38, %v1741
        %v1743 = vsel %vm1740, %v1742, %v1738
        %v1744 = vmul.f32 %v1600, %v1743
        %1745 = vrot.lane.b32.xlu0 %v1328, 64
        %v1746 = vpop.permute.xlu0 %1745
        %v1749 = vsel %vm540, %v1639, 0
        %1751 = vmatpush.msra.mxu0 0.0
        %1752 = vmatpush.msra.mxu0 0.0
        %1753 = vmatpush.msra.mxu0 0.0
        %1754 = vmatpush.msra.mxu0 0.0
        %1755 = vmatpush.msra.mxu0 0.0
        %1756 = vmatpush.msra.mxu0 0.0
        %1757 = vmatpush.msra.mxu0 0.0
        %1758 = vmatpush.msra.mxu0 0.0
        %1759 = vmatpush.msra.mxu0 0.0
        %1760 = vmatpush.msra.mxu0 0.0
        %1761 = vmatpush.msra.mxu0 0.0
        %1762 = vmatpush.msra.mxu0 0.0
        %1763 = vmatpush.msra.mxu0 0.0
        %1764 = vmatpush.msra.mxu0 0.0
        %1765 = vmatpush.msra.mxu0 0.0
        %1766 = vmatpush.msra.mxu0 %v1746
        %1767 = vmatmul.f32.gmra.mxu0 %v1749
        %v1768 = vpop.f32.mrf.mxu0
        %v1769 = vadd.f32 0.0, %v1768
        %1770 = vdwg.mxu0
        %1771 = vrot.lane.b32.xlu0 %v1332, 64
        %v1772 = vpop.permute.xlu0 %1771
        %v1775 = vsel %vm540, %v1654, 0
        %1777 = vmatpush.msra.mxu0 0.0
        %1778 = vmatpush.msra.mxu0 0.0
        %1779 = vmatpush.msra.mxu0 0.0
        %1780 = vmatpush.msra.mxu0 0.0
        %1781 = vmatpush.msra.mxu0 0.0
        %1782 = vmatpush.msra.mxu0 0.0
        %1783 = vmatpush.msra.mxu0 0.0
        %1784 = vmatpush.msra.mxu0 0.0
        %1785 = vmatpush.msra.mxu0 0.0
        %1786 = vmatpush.msra.mxu0 0.0
        %1787 = vmatpush.msra.mxu0 0.0
        %1788 = vmatpush.msra.mxu0 0.0
        %1789 = vmatpush.msra.mxu0 0.0
        %1790 = vmatpush.msra.mxu0 0.0
        %1791 = vmatpush.msra.mxu0 0.0
        %1792 = vmatpush.msra.mxu0 %v1772
        %1793 = vmatmul.f32.gmra.mxu0 %v1775
        %v1794 = vpop.f32.mrf.mxu0
        %v1795 = vadd.f32 0.0, %v1794
        %1796 = vdwg.mxu0
        %1797 = vrot.lane.b32.xlu0 %v1334, 64
        %v1798 = vpop.permute.xlu0 %1797
        %v1801 = vsel %vm540, %v1669, 0
        %1803 = vmatpush.msra.mxu0 0.0
        %1804 = vmatpush.msra.mxu0 0.0
        %1805 = vmatpush.msra.mxu0 0.0
        %1806 = vmatpush.msra.mxu0 0.0
        %1807 = vmatpush.msra.mxu0 0.0
        %1808 = vmatpush.msra.mxu0 0.0
        %1809 = vmatpush.msra.mxu0 0.0
        %1810 = vmatpush.msra.mxu0 0.0
        %1811 = vmatpush.msra.mxu0 0.0
        %1812 = vmatpush.msra.mxu0 0.0
        %1813 = vmatpush.msra.mxu0 0.0
        %1814 = vmatpush.msra.mxu0 0.0
        %1815 = vmatpush.msra.mxu0 0.0
        %1816 = vmatpush.msra.mxu0 0.0
        %1817 = vmatpush.msra.mxu0 0.0
        %1818 = vmatpush.msra.mxu0 %v1798
        %1819 = vmatmul.f32.gmra.mxu0 %v1801
        %v1820 = vpop.f32.mrf.mxu0
        %v1821 = vadd.f32 0.0, %v1820
        %1822 = vdwg.mxu0
        %1823 = vrot.lane.b32.xlu0 %v1336, 64
        %v1824 = vpop.permute.xlu0 %1823
        %v1827 = vsel %vm540, %v1684, 0
        %1829 = vmatpush.msra.mxu0 0.0
        %1830 = vmatpush.msra.mxu0 0.0
        %1831 = vmatpush.msra.mxu0 0.0
        %1832 = vmatpush.msra.mxu0 0.0
        %1833 = vmatpush.msra.mxu0 0.0
        %1834 = vmatpush.msra.mxu0 0.0
        %1835 = vmatpush.msra.mxu0 0.0
        %1836 = vmatpush.msra.mxu0 0.0
        %1837 = vmatpush.msra.mxu0 0.0
        %1838 = vmatpush.msra.mxu0 0.0
        %1839 = vmatpush.msra.mxu0 0.0
        %1840 = vmatpush.msra.mxu0 0.0
        %1841 = vmatpush.msra.mxu0 0.0
        %1842 = vmatpush.msra.mxu0 0.0
        %1843 = vmatpush.msra.mxu0 0.0
        %1844 = vmatpush.msra.mxu0 %v1824
        %1845 = vmatmul.f32.gmra.mxu0 %v1827
        %v1846 = vpop.f32.mrf.mxu0
        %v1847 = vadd.f32 0.0, %v1846
        %1848 = vdwg.mxu0
        %1849 = vrot.lane.b32.xlu0 %v1338, 64
        %v1850 = vpop.permute.xlu0 %1849
        %v1853 = vsel %vm540, %v1699, 0
        %1855 = vmatpush.msra.mxu0 0.0
        %1856 = vmatpush.msra.mxu0 0.0
        %1857 = vmatpush.msra.mxu0 0.0
        %1858 = vmatpush.msra.mxu0 0.0
        %1859 = vmatpush.msra.mxu0 0.0
        %1860 = vmatpush.msra.mxu0 0.0
        %1861 = vmatpush.msra.mxu0 0.0
        %1862 = vmatpush.msra.mxu0 0.0
        %1863 = vmatpush.msra.mxu0 0.0
        %1864 = vmatpush.msra.mxu0 0.0
        %1865 = vmatpush.msra.mxu0 0.0
        %1866 = vmatpush.msra.mxu0 0.0
        %1867 = vmatpush.msra.mxu0 0.0
        %1868 = vmatpush.msra.mxu0 0.0
        %1869 = vmatpush.msra.mxu0 0.0
        %1870 = vmatpush.msra.mxu0 %v1850
        %1871 = vmatmul.f32.gmra.mxu0 %v1853
        %v1872 = vpop.f32.mrf.mxu0
        %v1873 = vadd.f32 0.0, %v1872
        %1874 = vdwg.mxu0
        %1875 = vrot.lane.b32.xlu0 %v1340, 64
        %v1876 = vpop.permute.xlu0 %1875
        %v1879 = vsel %vm540, %v1714, 0
        %1881 = vmatpush.msra.mxu0 0.0
        %1882 = vmatpush.msra.mxu0 0.0
        %1883 = vmatpush.msra.mxu0 0.0
        %1884 = vmatpush.msra.mxu0 0.0
        %1885 = vmatpush.msra.mxu0 0.0
        %1886 = vmatpush.msra.mxu0 0.0
        %1887 = vmatpush.msra.mxu0 0.0
        %1888 = vmatpush.msra.mxu0 0.0
        %1889 = vmatpush.msra.mxu0 0.0
        %1890 = vmatpush.msra.mxu0 0.0
        %1891 = vmatpush.msra.mxu0 0.0
        %1892 = vmatpush.msra.mxu0 0.0
        %1893 = vmatpush.msra.mxu0 0.0
        %1894 = vmatpush.msra.mxu0 0.0
        %1895 = vmatpush.msra.mxu0 0.0
        %1896 = vmatpush.msra.mxu0 %v1876
        %1897 = vmatmul.f32.gmra.mxu0 %v1879
        %v1898 = vpop.f32.mrf.mxu0
        %v1899 = vadd.f32 0.0, %v1898
        %1900 = vdwg.mxu0
        %1901 = vrot.lane.b32.xlu0 %v1342, 64
        %v1902 = vpop.permute.xlu0 %1901
        %v1905 = vsel %vm540, %v1729, 0
        %1907 = vmatpush.msra.mxu0 0.0
        %1908 = vmatpush.msra.mxu0 0.0
        %1909 = vmatpush.msra.mxu0 0.0
        %1910 = vmatpush.msra.mxu0 0.0
        %1911 = vmatpush.msra.mxu0 0.0
        %1912 = vmatpush.msra.mxu0 0.0
        %1913 = vmatpush.msra.mxu0 0.0
        %1914 = vmatpush.msra.mxu0 0.0
        %1915 = vmatpush.msra.mxu0 0.0
        %1916 = vmatpush.msra.mxu0 0.0
        %1917 = vmatpush.msra.mxu0 0.0
        %1918 = vmatpush.msra.mxu0 0.0
        %1919 = vmatpush.msra.mxu0 0.0
        %1920 = vmatpush.msra.mxu0 0.0
        %1921 = vmatpush.msra.mxu0 0.0
        %1922 = vmatpush.msra.mxu0 %v1902
        %1923 = vmatmul.f32.gmra.mxu0 %v1905
        %v1924 = vpop.f32.mrf.mxu0
        %v1925 = vadd.f32 0.0, %v1924
        %1926 = vdwg.mxu0
        %1927 = vrot.lane.b32.xlu0 %v1344, 64
        %v1928 = vpop.permute.xlu0 %1927
        %v1931 = vsel %vm540, %v1744, 0
        %1933 = vmatpush.msra.mxu0 0.0
        %1934 = vmatpush.msra.mxu0 0.0
        %1935 = vmatpush.msra.mxu0 0.0
        %1936 = vmatpush.msra.mxu0 0.0
        %1937 = vmatpush.msra.mxu0 0.0
        %1938 = vmatpush.msra.mxu0 0.0
        %1939 = vmatpush.msra.mxu0 0.0
        %1940 = vmatpush.msra.mxu0 0.0
        %1941 = vmatpush.msra.mxu0 0.0
        %1942 = vmatpush.msra.mxu0 0.0
        %1943 = vmatpush.msra.mxu0 0.0
        %1944 = vmatpush.msra.mxu0 0.0
        %1945 = vmatpush.msra.mxu0 0.0
        %1946 = vmatpush.msra.mxu0 0.0
        %1947 = vmatpush.msra.mxu0 0.0
        %1948 = vmatpush.msra.mxu0 %v1928
        %1949 = vmatmul.f32.gmra.mxu0 %v1931
        %v1950 = vpop.f32.mrf.mxu0
        %v1951 = vadd.f32 0.0, %v1950
        %1952 = vdwg.mxu0
        %s1953 = scalar_lea.vmem %s2, 32
        %v1954 = vld [vmem:[%s1953] sm:$0xf]
        %v1955 = vld [vmem:[%s1953 + $0x4] sm:$0xf]
        %v1956 = vld [vmem:[%s1953 + $0x8] sm:$0xf]
        %v1957 = vld [vmem:[%s1953 + $0xc] sm:$0xf]
        %v1958 = vld [vmem:[%s1953 + $0x10] sm:$0xf]
        %v1959 = vld [vmem:[%s1953 + $0x14] sm:$0xf]
        %v1960 = vld [vmem:[%s1953 + $0x18] sm:$0xf]
        %v1961 = vld [vmem:[%s1953 + $0x1c] sm:$0xf]
        %v1963 = vsel %vm333, %v1769, 0
        %v1966 = vsel %vm952, %v1954, 0
        %1968 = vmatpush.msra.mxu0 0.0
        %1969 = vmatpush.msra.mxu0 0.0
        %1970 = vmatpush.msra.mxu0 0.0
        %1971 = vmatpush.msra.mxu0 0.0
        %1972 = vmatpush.msra.mxu0 0.0
        %1973 = vmatpush.msra.mxu0 0.0
        %1974 = vmatpush.msra.mxu0 0.0
        %1975 = vmatpush.msra.mxu0 0.0
        %1976 = vmatpush.msra.mxu0 0.0
        %1977 = vmatpush.msra.mxu0 0.0
        %1978 = vmatpush.msra.mxu0 0.0
        %1979 = vmatpush.msra.mxu0 0.0
        %1980 = vmatpush.msra.mxu0 0.0
        %1981 = vmatpush.msra.mxu0 0.0
        %1982 = vmatpush.msra.mxu0 0.0
        %1983 = vmatpush.msra.mxu0 %v1966
        %1984 = vmatmul.f32.gmra.mxu0 %v1963
        %v1985 = vpop.f32.mrf.mxu0
        %v1986 = vadd.f32 0.0, %v1985
        %1987 = vdwg.mxu0
        %v1989 = vsel %vm333, %v1795, 0
        %v1992 = vsel %vm952, %v1955, 0
        %1994 = vmatpush.msra.mxu0 0.0
        %1995 = vmatpush.msra.mxu0 0.0
        %1996 = vmatpush.msra.mxu0 0.0
        %1997 = vmatpush.msra.mxu0 0.0
        %1998 = vmatpush.msra.mxu0 0.0
        %1999 = vmatpush.msra.mxu0 0.0
        %2000 = vmatpush.msra.mxu0 0.0
        %2001 = vmatpush.msra.mxu0 0.0
        %2002 = vmatpush.msra.mxu0 0.0
        %2003 = vmatpush.msra.mxu0 0.0
        %2004 = vmatpush.msra.mxu0 0.0
        %2005 = vmatpush.msra.mxu0 0.0
        %2006 = vmatpush.msra.mxu0 0.0
        %2007 = vmatpush.msra.mxu0 0.0
        %2008 = vmatpush.msra.mxu0 0.0
        %2009 = vmatpush.msra.mxu0 %v1992
        %2010 = vmatmul.f32.gmra.mxu0 %v1989
        %v2011 = vpop.f32.mrf.mxu0
        %v2012 = vadd.f32 0.0, %v2011
        %2013 = vdwg.mxu0
        %v2015 = vsel %vm333, %v1821, 0
        %v2018 = vsel %vm952, %v1956, 0
        %2020 = vmatpush.msra.mxu0 0.0
        %2021 = vmatpush.msra.mxu0 0.0
        %2022 = vmatpush.msra.mxu0 0.0
        %2023 = vmatpush.msra.mxu0 0.0
        %2024 = vmatpush.msra.mxu0 0.0
        %2025 = vmatpush.msra.mxu0 0.0
        %2026 = vmatpush.msra.mxu0 0.0
        %2027 = vmatpush.msra.mxu0 0.0
        %2028 = vmatpush.msra.mxu0 0.0
        %2029 = vmatpush.msra.mxu0 0.0
        %2030 = vmatpush.msra.mxu0 0.0
        %2031 = vmatpush.msra.mxu0 0.0
        %2032 = vmatpush.msra.mxu0 0.0
        %2033 = vmatpush.msra.mxu0 0.0
        %2034 = vmatpush.msra.mxu0 0.0
        %2035 = vmatpush.msra.mxu0 %v2018
        %2036 = vmatmul.f32.gmra.mxu0 %v2015
        %v2037 = vpop.f32.mrf.mxu0
        %v2038 = vadd.f32 0.0, %v2037
        %2039 = vdwg.mxu0
        %v2041 = vsel %vm333, %v1847, 0
        %v2044 = vsel %vm952, %v1957, 0
        %2046 = vmatpush.msra.mxu0 0.0
        %2047 = vmatpush.msra.mxu0 0.0
        %2048 = vmatpush.msra.mxu0 0.0
        %2049 = vmatpush.msra.mxu0 0.0
        %2050 = vmatpush.msra.mxu0 0.0
        %2051 = vmatpush.msra.mxu0 0.0
        %2052 = vmatpush.msra.mxu0 0.0
        %2053 = vmatpush.msra.mxu0 0.0
        %2054 = vmatpush.msra.mxu0 0.0
        %2055 = vmatpush.msra.mxu0 0.0
        %2056 = vmatpush.msra.mxu0 0.0
        %2057 = vmatpush.msra.mxu0 0.0
        %2058 = vmatpush.msra.mxu0 0.0
        %2059 = vmatpush.msra.mxu0 0.0
        %2060 = vmatpush.msra.mxu0 0.0
        %2061 = vmatpush.msra.mxu0 %v2044
        %2062 = vmatmul.f32.gmra.mxu0 %v2041
        %v2063 = vpop.f32.mrf.mxu0
        %v2064 = vadd.f32 0.0, %v2063
        %2065 = vdwg.mxu0
        %v2067 = vsel %vm333, %v1873, 0
        %v2070 = vsel %vm952, %v1958, 0
        %2072 = vmatpush.msra.mxu0 0.0
        %2073 = vmatpush.msra.mxu0 0.0
        %2074 = vmatpush.msra.mxu0 0.0
        %2075 = vmatpush.msra.mxu0 0.0
        %2076 = vmatpush.msra.mxu0 0.0
        %2077 = vmatpush.msra.mxu0 0.0
        %2078 = vmatpush.msra.mxu0 0.0
        %2079 = vmatpush.msra.mxu0 0.0
        %2080 = vmatpush.msra.mxu0 0.0
        %2081 = vmatpush.msra.mxu0 0.0
        %2082 = vmatpush.msra.mxu0 0.0
        %2083 = vmatpush.msra.mxu0 0.0
        %2084 = vmatpush.msra.mxu0 0.0
        %2085 = vmatpush.msra.mxu0 0.0
        %2086 = vmatpush.msra.mxu0 0.0
        %2087 = vmatpush.msra.mxu0 %v2070
        %2088 = vmatmul.f32.gmra.mxu0 %v2067
        %v2089 = vpop.f32.mrf.mxu0
        %v2090 = vadd.f32 0.0, %v2089
        %2091 = vdwg.mxu0
        %v2093 = vsel %vm333, %v1899, 0
        %v2096 = vsel %vm952, %v1959, 0
        %2098 = vmatpush.msra.mxu0 0.0
        %2099 = vmatpush.msra.mxu0 0.0
        %2100 = vmatpush.msra.mxu0 0.0
        %2101 = vmatpush.msra.mxu0 0.0
        %2102 = vmatpush.msra.mxu0 0.0
        %2103 = vmatpush.msra.mxu0 0.0
        %2104 = vmatpush.msra.mxu0 0.0
        %2105 = vmatpush.msra.mxu0 0.0
        %2106 = vmatpush.msra.mxu0 0.0
        %2107 = vmatpush.msra.mxu0 0.0
        %2108 = vmatpush.msra.mxu0 0.0
        %2109 = vmatpush.msra.mxu0 0.0
        %2110 = vmatpush.msra.mxu0 0.0
        %2111 = vmatpush.msra.mxu0 0.0
        %2112 = vmatpush.msra.mxu0 0.0
        %2113 = vmatpush.msra.mxu0 %v2096
        %2114 = vmatmul.f32.gmra.mxu0 %v2093
        %v2115 = vpop.f32.mrf.mxu0
        %v2116 = vadd.f32 0.0, %v2115
        %2117 = vdwg.mxu0
        %v2119 = vsel %vm333, %v1925, 0
        %v2122 = vsel %vm952, %v1960, 0
        %2124 = vmatpush.msra.mxu0 0.0
        %2125 = vmatpush.msra.mxu0 0.0
        %2126 = vmatpush.msra.mxu0 0.0
        %2127 = vmatpush.msra.mxu0 0.0
        %2128 = vmatpush.msra.mxu0 0.0
        %2129 = vmatpush.msra.mxu0 0.0
        %2130 = vmatpush.msra.mxu0 0.0
        %2131 = vmatpush.msra.mxu0 0.0
        %2132 = vmatpush.msra.mxu0 0.0
        %2133 = vmatpush.msra.mxu0 0.0
        %2134 = vmatpush.msra.mxu0 0.0
        %2135 = vmatpush.msra.mxu0 0.0
        %2136 = vmatpush.msra.mxu0 0.0
        %2137 = vmatpush.msra.mxu0 0.0
        %2138 = vmatpush.msra.mxu0 0.0
        %2139 = vmatpush.msra.mxu0 %v2122
        %2140 = vmatmul.f32.gmra.mxu0 %v2119
        %v2141 = vpop.f32.mrf.mxu0
        %v2142 = vadd.f32 0.0, %v2141
        %2143 = vdwg.mxu0
        %v2145 = vsel %vm333, %v1951, 0
        %v2148 = vsel %vm952, %v1961, 0
        %2150 = vmatpush.msra.mxu0 0.0
        %2151 = vmatpush.msra.mxu0 0.0
        %2152 = vmatpush.msra.mxu0 0.0
        %2153 = vmatpush.msra.mxu0 0.0
        %2154 = vmatpush.msra.mxu0 0.0
        %2155 = vmatpush.msra.mxu0 0.0
        %2156 = vmatpush.msra.mxu0 0.0
        %2157 = vmatpush.msra.mxu0 0.0
        %2158 = vmatpush.msra.mxu0 0.0
        %2159 = vmatpush.msra.mxu0 0.0
        %2160 = vmatpush.msra.mxu0 0.0
        %2161 = vmatpush.msra.mxu0 0.0
        %2162 = vmatpush.msra.mxu0 0.0
        %2163 = vmatpush.msra.mxu0 0.0
        %2164 = vmatpush.msra.mxu0 0.0
        %2165 = vmatpush.msra.mxu0 %v2148
        %2166 = vmatmul.f32.gmra.mxu0 %v2145
        %v2167 = vpop.f32.mrf.mxu0
        %v2168 = vadd.f32 0.0, %v2167
        %2169 = vdwg.mxu0
        %v2170 = vsel %vm292, %v1986, 0.0
        %v2171 = vsel %vm292, %v2012, 0.0
        %v2172 = vadd.f32 %v2170, %v2171
        %v2173 = vsel %vm292, %v2038, 0.0
        %v2174 = vadd.f32 %v2172, %v2173
        %v2175 = vsel %vm292, %v2064, 0.0
        %v2176 = vadd.f32 %v2174, %v2175
        %v2177 = vsel %vm292, %v2090, 0.0
        %v2178 = vadd.f32 %v2176, %v2177
        %v2179 = vsel %vm292, %v2116, 0.0
        %v2180 = vadd.f32 %v2178, %v2179
        %v2181 = vsel %vm292, %v2142, 0.0
        %v2182 = vadd.f32 %v2180, %v2181
        %v2183 = vsel %vm292, %v2168, 0.0
        %v2184 = vadd.f32 %v2182, %v2183
        %v2185 = vperm.slane %v1301, 0
        %v2186 = vadd.f32 %v2184, %v2185
        %v2187 = vmul.f32 %v1299, 1.4142135
        %v2188 = vadd.f32 %v2186, %v2187
        %v2189 = vsel %vm292, %v2188, 0.0
        %2190 = vadd.xlane.f32.xlu0 %v2189
        %v2191 = vpop.xlane.xlu0 %2190
        %v2192 = vmul.f32 %v2191, %v1186
        %v2193 = vsub.f32 %v2188, %v2192
        %v2194 = vmul.f32 %v2193, %v2193
        %v2195 = vsel %vm292, %v2194, 0.0
        %2196 = vadd.xlane.f32.xlu0 %v2195
        %v2197 = vpop.xlane.xlu0 %2196
        %v2198 = vmul.f32 %v2197, %v1186
        %v2199 = vadd.f32 %v2198, 1e-05
        %v2200 = vrsqrt.pop %v2199
        %v2201 = vmul.f32 %v2200, %v2199
        %v2202 = vmul.f32 %v2201, %v2200
        %v2203 = vmul.f32 0.5, %v2202
        %v2204 = vsub.f32 1.5, %v2203
        %v2205 = vmul.f32 %v2200, %v2204
        %vm2206 = vweird.f32 %v2199
        %vm2207 = vweird.f32 %v2200
        %vm2208 = vmor %vm2206, %vm2207
        %v2209 = vsel %vm2208, %v2200, %v2205
        %v2210 = vmul.f32 %v2193, %v2209
        %v2211 = vperm.slane %v1301, 1
        %v2212 = vmul.f32 %v2210, %v2211
        %v2213 = vperm.slane %v1301, 2
        %v2214 = vadd.f32 %v2212, %v2213
        %s2215 = scalar_lea.vmem %s3, 32
        %v2216 = vld [vmem:[%s2215] sm:$0xff]
        %v2217 = vld [vmem:[%s2215 + $0x8] sm:$0xff]
        %v2218 = vld [vmem:[%s2215 + $0x10] sm:$0xff]
        %v2219 = vld [vmem:[%s2215 + $0x18] sm:$0xff]
        %v2220 = vperm.slane %v1301, 3
        %v2222 = vsel %vm292, %v2214, 0
        %2224 = vmatpush.msra.mxu0 0.0
        %2225 = vmatpush.msra.mxu0 0.0
        %2226 = vmatpush.msra.mxu0 0.0
        %2227 = vmatpush.msra.mxu0 0.0
        %2228 = vmatpush.msra.mxu0 0.0
        %2229 = vmatpush.msra.mxu0 0.0
        %2230 = vmatpush.msra.mxu0 0.0
        %2231 = vmatpush.msra.mxu0 0.0
        %2232 = vmatpush.msra.mxu0 0.0
        %2233 = vmatpush.msra.mxu0 0.0
        %2234 = vmatpush.msra.mxu0 0.0
        %2235 = vmatpush.msra.mxu0 0.0
        %2236 = vmatpush.msra.mxu0 %v2219
        %2237 = vmatpush.msra.mxu0 %v2218
        %2238 = vmatpush.msra.mxu0 %v2217
        %2239 = vmatpush.msra.mxu0 %v2216
        %2240 = vmatmul.f32.gmra.mxu0 %v2222
        %v2241 = vpop.f32.mrf.mxu0
        %v2242 = vadd.f32 %v2220, %v2241
        %2243 = vdwg.mxu0
        %v2244 = vmax.f32 %v2242, 0.0
        %s2245 = scalar_lea.vmem %s4, 64
        %v2246 = vld [vmem:[%s2245] sm:$0xff]
        %v2247 = vld [vmem:[%s2245 + $0x8] sm:$0xff]
        %v2248 = vld [vmem:[%s2245 + $0x10] sm:$0xff]
        %v2249 = vld [vmem:[%s2245 + $0x18] sm:$0xff]
        %v2250 = vld [vmem:[%s2245 + $0x20] sm:$0xff]
        %v2251 = vld [vmem:[%s2245 + $0x28] sm:$0xff]
        %v2252 = vld [vmem:[%s2245 + $0x30] sm:$0xff]
        %v2253 = vld [vmem:[%s2245 + $0x38] sm:$0xff]
        %v2254 = vperm.slane %v1301, 4
        %v2256 = vsel %vm1248, %v2244, 0
        %2258 = vmatpush.msra.mxu0 0.0
        %2259 = vmatpush.msra.mxu0 0.0
        %2260 = vmatpush.msra.mxu0 0.0
        %2261 = vmatpush.msra.mxu0 0.0
        %2262 = vmatpush.msra.mxu0 0.0
        %2263 = vmatpush.msra.mxu0 0.0
        %2264 = vmatpush.msra.mxu0 0.0
        %2265 = vmatpush.msra.mxu0 0.0
        %2266 = vmatpush.msra.mxu0 %v2253
        %2267 = vmatpush.msra.mxu0 %v2252
        %2268 = vmatpush.msra.mxu0 %v2251
        %2269 = vmatpush.msra.mxu0 %v2250
        %2270 = vmatpush.msra.mxu0 %v2249
        %2271 = vmatpush.msra.mxu0 %v2248
        %2272 = vmatpush.msra.mxu0 %v2247
        %2273 = vmatpush.msra.mxu0 %v2246
        %2274 = vmatmul.f32.gmra.mxu0 %v2256
        %v2275 = vpop.f32.mrf.mxu0
        %v2276 = vadd.f32 %v2254, %v2275
        %2277 = vdwg.mxu0
        %v2278 = vmul.f32 %v2214, 1.4142135
        %v2279 = vadd.f32 %v2276, %v2278
        %v2280 = vsel %vm292, %v2279, 0.0
        %2281 = vadd.xlane.f32.xlu0 %v2280
        %v2282 = vpop.xlane.xlu0 %2281
        %v2283 = vmul.f32 %v2282, %v1186
        %v2284 = vsub.f32 %v2279, %v2283
        %v2285 = vmul.f32 %v2284, %v2284
        %v2286 = vsel %vm292, %v2285, 0.0
        %2287 = vadd.xlane.f32.xlu0 %v2286
        %v2288 = vpop.xlane.xlu0 %2287
        %v2289 = vmul.f32 %v2288, %v1186
        %v2290 = vadd.f32 %v2289, 1e-05
        %v2291 = vrsqrt.pop %v2290
        %v2292 = vmul.f32 %v2291, %v2290
        %v2293 = vmul.f32 %v2292, %v2291
        %v2294 = vmul.f32 0.5, %v2293
        %v2295 = vsub.f32 1.5, %v2294
        %v2296 = vmul.f32 %v2291, %v2295
        %vm2297 = vweird.f32 %v2290
        %vm2298 = vweird.f32 %v2291
        %vm2299 = vmor %vm2297, %vm2298
        %v2300 = vsel %vm2299, %v2291, %v2296
        %v2301 = vmul.f32 %v2284, %v2300
        %v2302 = vperm.slane %v1301, 5
        %v2303 = vmul.f32 %v2301, %v2302
        %v2304 = vperm.slane %v1301, 6
        %v2305 = vadd.f32 %v2303, %v2304
        %2306 = vst.msk [vmem:[%s285] sm:$0xff] %vm292, %v2305
        %s2307 = sand.u32 %s163, 1
        %s2308 = scalar_lea.sflag [#allocation4], %s2307
        %s2309 = sand.u32 %s163, 1
        %s2310 = smul.addr %s2309, 8
        %s2311 = scalar_lea.vmem [#allocation7], %s2310
        // Predicated region
        $region53: #{tpu_custom_call.1} parent=43 // pred_check
          %p2312 = pneg %p173
        $region54: #{tpu_custom_call.1} parent=43 // pred_check_branch
          %2314 = sbr.rel (%p2312) target = $region56
        $region55: #{tpu_custom_call.1} parent=43 // pred_region
          %2316 = vsyncadd %s2308, 0
          %s2317 = smul.addr %s24, 8
          %s2318 = scalar_lea.hbm %s6, %s2317
          %s2320 = sshll.u32 %s2311, 4
          %s2321 = int_to_ptr.vmem [resolvable:$true] %s2320
          %s2322 = sshll.u32 %s2318, 4
          %s2323 = int_to_ptr.hbm [resolvable:$true] %s2322
          %2325 = dma.vmem_to_hbm [thread:$0]  %s2321, 128, %s2323, %s2308
        $region56: #{tpu_custom_call.1} parent=43 // pred_fallthru
          _
      $region44: #{tpu_custom_call.1} parent=5 // pred_fallthru
        _
      %p2326 = scmp.le.s32.totalorder 2, %s19
      // Predicated region
      $region57: #{tpu_custom_call.1} parent=5 // pred_check
        %p2327 = pneg %p2326
      $region58: #{tpu_custom_call.1} parent=5 // pred_check_branch
        %2329 = sbr.rel (%p2327) target = $region60
      $region59: #{tpu_custom_call.1} parent=5 // pred_region
        %s2330 = ssub.s32 %s19, 2
        // Predicated region
        $region61: #{tpu_custom_call.1} parent=59 // pred_check
          %p2331 = pneg %p179
        $region62: #{tpu_custom_call.1} parent=59 // pred_check_branch
          %2333 = sbr.rel (%p2331) target = $region64
        $region63: #{tpu_custom_call.1} parent=59 // pred_region
          %s2334 = sand.u32 %s164, 1
          %s2335 = scalar_lea.sflag [#allocation4], %s2334
          %s2336 = sand.u32 %s164, 1
          %s2337 = smul.addr %s2336, 8
          %s2338 = scalar_lea.vmem [#allocation7], %s2337
          %2340 = dma.done %s2335, 128
        $region64: #{tpu_custom_call.1} parent=59 // pred_fallthru
          _
      $region60: #{tpu_custom_call.1} parent=5 // pred_fallthru
        _
    $region6: #{tpu_custom_call.1} parent=1 // loop_footer
      %s23 = sadd.s32 1, %s19
    $region7: #{tpu_custom_call.1} parent=1 // loop_footer_branch
      %18 = sbr.rel target = $region3
    $region8: #{tpu_custom_call.1} parent=1 // loop_exit
      _
    %2341 = vsyncpa [#allocation3], 1
    %s2342 = scalar_lea.sflag [#allocation3], 1
    %2343 = vsyncpa %s2342, 1
    %2344 = vsyncpa [#allocation6], 1
    %2345 = vsyncpa [#allocation4], 1
    %s2346 = scalar_lea.sflag [#allocation4], 1
    %2347 = vsyncpa %s2346, 1

</llo_original>
